<compile_context>
chip_gen: v6e
topology: v6e:2x2x1
jax: 0.10.0
libtpu: 0.0.40
codegen_flags: <defaults>
</compile_context>

<pallas_src>
import random
import functools

import jax
import jax.numpy as jnp
from jax.experimental import pallas as pl
from jax.experimental.pallas import tpu as pltpu


def _round_up(x, m):
    return ((x + m - 1) // m) * m


# ----------------------------------------------------------------------------
# Encoder: whole GRU recurrence fused into one kernel, grid over time.
# ----------------------------------------------------------------------------

def _encoder_kernel(x_ref, w_ih_ref, w_hh_ref, b_ih_ref, b_hh_ref,
                    h_out_ref, h_scr):
    t = pl.program_id(0)
    H = h_scr.shape[1]

    @pl.when(t == 0)
    def _():
        h_scr[...] = jnp.zeros_like(h_scr)

    x = x_ref[0]            # [B, E]
    h = h_scr[...]          # [B, H]

    gi = jnp.dot(x, w_ih_ref[...], preferred_element_type=jnp.float32) + b_ih_ref[...]
    gh = jnp.dot(h, w_hh_ref[...], preferred_element_type=jnp.float32) + b_hh_ref[...]

    # PyTorch GRU gate order: r, z, n (lane-aligned slices since H = 128).
    r = jax.nn.sigmoid(gi[:, 0:H] + gh[:, 0:H])
    z = jax.nn.sigmoid(gi[:, H:2 * H] + gh[:, H:2 * H])
    n = jnp.tanh(gi[:, 2 * H:3 * H] + r * gh[:, 2 * H:3 * H])
    h_new = (1.0 - z) * n + z * h

    h_scr[...] = h_new
    h_out_ref[...] = h_new          # resident output block; final write persists


def encoder_forward(params, embedded):
    """embedded: [src_len, BP, E] f32 -> final hidden (context) [BP, H]."""
    src_len, BP, E = embedded.shape
    H = params["enc_w_hh"].shape[0]
    H3 = 3 * H

    return pl.pallas_call(
        _encoder_kernel,
        out_shape=jax.ShapeDtypeStruct((BP, H), jnp.float32),
        grid_spec=pltpu.PrefetchScalarGridSpec(
            num_scalar_prefetch=0,
            grid=(src_len,),
            in_specs=[
                pl.BlockSpec((1, BP, E), lambda t: (t, 0, 0)),   # x[t]
                pl.BlockSpec((E, H3), lambda t: (0, 0)),         # W_ih (resident)
                pl.BlockSpec((H, H3), lambda t: (0, 0)),         # W_hh (resident)
                pl.BlockSpec((1, H3), lambda t: (0, 0)),         # b_ih
                pl.BlockSpec((1, H3), lambda t: (0, 0)),         # b_hh
            ],
            out_specs=pl.BlockSpec((BP, H), lambda t: (0, 0)),
            scratch_shapes=[pltpu.VMEM((BP, H), jnp.float32)],
        ),
        compiler_params=pltpu.CompilerParams(dimension_semantics=("arbitrary",)),
    )(embedded, params["enc_w_ih"], params["enc_w_hh"],
      params["enc_b_ih"], params["enc_b_hh"])


# ----------------------------------------------------------------------------
# Decoder: embedding + GRU + Linear + argmax feedback, fused, grid over steps.
# ----------------------------------------------------------------------------

def _make_decoder_kernel(v_real):
    def kernel(tf_ref,                                      # scalar prefetch (SMEM)
               trg_oh_ref, ctx_ref, emb_ref,
               w_ih_e_ref, w_ih_c_ref, w_hh_ref, b_ih_ref, b_hh_ref,
               w_lh_ref, w_lc_ref, w_le_ref, b_l_ref,
               out_ref, h_scr, oh_scr, gic_scr, lc_scr):
        t = pl.program_id(0)
        BP, VP = oh_scr.shape
        H = h_scr.shape[1]

        @pl.when(t == 0)
        def _():
            ctx = ctx_ref[...]
            h_scr[...] = ctx                   # hidden = context initially
            oh_scr[...] = jnp.zeros_like(oh_scr)
            # Context is constant across decode steps -> precompute its
            # contribution to the GRU input gates and to the Linear logits
            # (biases folded in) ONCE and cache in VMEM scratch.
            gic_scr[...] = (jnp.dot(ctx, w_ih_c_ref[...],
                                    preferred_element_type=jnp.float32)
                            + b_ih_ref[...])
            lc_scr[...] = (jnp.dot(ctx, w_lc_ref[...],
                                   preferred_element_type=jnp.float32)
                           + b_l_ref[...])

        # Input token one-hot: teacher-forced trg[t] or previous step's argmax.
        tf_f = (tf_ref[t] == 1).astype(jnp.float32)
        inp_oh = tf_f * trg_oh_ref[0] + (1.0 - tf_f) * oh_scr[...]     # [B, VP]

        # Embedding gather as a one-hot matmul (keeps everything in the kernel).
        embedded = jnp.dot(inp_oh, emb_ref[...],
                           preferred_element_type=jnp.float32)          # [B, E]
        h = h_scr[...]

        # GRU with weights split along the input axis (no activation concat).
        gi = (jnp.dot(embedded, w_ih_e_ref[...], preferred_element_type=jnp.float32)
              + gic_scr[...])
        gh = jnp.dot(h, w_hh_ref[...], preferred_element_type=jnp.float32) + b_hh_ref[...]

        r = jax.nn.sigmoid(gi[:, 0:H] + gh[:, 0:H])
        z = jax.nn.sigmoid(gi[:, H:2 * H] + gh[:, H:2 * H])
        n = jnp.tanh(gi[:, 2 * H:3 * H] + r * gh[:, 2 * H:3 * H])
        h_new = (1.0 - z) * n + z * h
        h_scr[...] = h_new

        # Linear(cat(output, context, embedded)) with split weights, padded vocab.
        logits = (jnp.dot(h_new, w_lh_ref[...], preferred_element_type=jnp.float32)
                  + jnp.dot(embedded, w_le_ref[...], preferred_element_type=jnp.float32)
                  + lc_scr[...])
        out_ref[0] = logits

        # argmax over the REAL vocab -> one-hot feedback token for next step.
        lane = jax.lax.broadcasted_iota(jnp.int32, (BP, VP), 1)
        masked = jnp.where(lane < v_real, logits, jnp.float32(-1e30))
        mval = jnp.max(masked, axis=1, keepdims=True)
        idx = jnp.min(jnp.where(masked == mval, lane, VP), axis=1, keepdims=True)
        oh_scr[...] = (lane == idx).astype(jnp.float32)

    return kernel


def decoder_forward(params, tf_mask, trg_onehot, context, de_vocab):
    """trg_onehot: [n_steps, BP, VP], context: [BP, H] -> logits [n_steps, BP, VP]."""
    n_steps, BP, VP = trg_onehot.shape
    H = params["dec_w_hh"].shape[0]
    E = params["dec_emb"].shape[1]
    H3 = 3 * H

    const2 = lambda t, tf: (0, 0)     # VMEM-resident (weights / context / biases)

    return pl.pallas_call(
        _make_decoder_kernel(de_vocab),
        out_shape=jax.ShapeDtypeStruct((n_steps, BP, VP), jnp.float32),
        grid_spec=pltpu.PrefetchScalarGridSpec(
            num_scalar_prefetch=1,                    # tf_mask -> SMEM
            grid=(n_steps,),
            in_specs=[
                pl.BlockSpec((1, BP, VP), lambda t, tf: (t, 0, 0)),  # trg one-hot
                pl.BlockSpec((BP, H), const2),                       # context
                pl.BlockSpec((VP, E), const2),                       # dec embedding
                pl.BlockSpec((E, H3), const2),                       # W_ih (emb part)
                pl.BlockSpec((H, H3), const2),                       # W_ih (ctx part)
                pl.BlockSpec((H, H3), const2),                       # W_hh
                pl.BlockSpec((1, H3), const2),                       # b_ih
                pl.BlockSpec((1, H3), const2),                       # b_hh
                pl.BlockSpec((H, VP), const2),                       # W_lin (output part)
                pl.BlockSpec((H, VP), const2),                       # W_lin (context part)
                pl.BlockSpec((E, VP), const2),                       # W_lin (embedded part)
                pl.BlockSpec((1, VP), const2),                       # b_lin
            ],
            out_specs=pl.BlockSpec((1, BP, VP), lambda t, tf: (t, 0, 0)),
            scratch_shapes=[pltpu.VMEM((BP, H), jnp.float32),    # carried hidden
                            pltpu.VMEM((BP, VP), jnp.float32),   # carried top1 one-hot
                            pltpu.VMEM((BP, H3), jnp.float32),   # ctx@W_ih_c + b_ih (cached)
                            pltpu.VMEM((BP, VP), jnp.float32)],  # ctx@W_lin_c + b_lin (cached)
        ),
        compiler_params=pltpu.CompilerParams(dimension_semantics=("arbitrary",)),
    )(tf_mask, trg_onehot, context, params["dec_emb"],
      params["dec_w_ih_e"], params["dec_w_ih_c"], params["dec_w_hh"],
      params["dec_b_ih"], params["dec_b_hh"],
      params["dec_lin_w_h"], params["dec_lin_w_c"], params["dec_lin_w_e"],
      params["dec_lin_b"])


# ----------------------------------------------------------------------------
# Parameters (pre-transposed, split and padded to hardware-friendly layouts)
# ----------------------------------------------------------------------------

def init_params(key, en_vocab, de_vocab, embed_dim, hidden_dim):
    E, H = embed_dim, hidden_dim
    VP = _round_up(de_vocab, 128)
    ks = jax.random.split(key, 15)
    s = 0.1

    def u(k, shape):
        return (jax.random.uniform(k, shape, jnp.float32) * 2.0 - 1.0) * s

    def pad_cols(w, cols):
        return jnp.pad(w, ((0, 0), (0, cols - w.shape[1])))

    dec_emb = jnp.pad(u(ks[5], (de_vocab, E)), ((0, VP - de_vocab), (0, 0)))

    return {
        # Encoder
        "enc_emb": u(ks[0], (en_vocab, E)),
        "enc_w_ih": u(ks[1], (E, 3 * H)),
        "enc_w_hh": u(ks[2], (H, 3 * H)),
        "enc_b_ih": u(ks[3], (1, 3 * H)),
        "enc_b_hh": u(ks[4], (1, 3 * H)),
        # Decoder (GRU input weight split: embedding part / context part)
        "dec_emb": dec_emb,                       # [VP, E]
        "dec_w_ih_e": u(ks[6], (E, 3 * H)),
        "dec_w_ih_c": u(ks[7], (H, 3 * H)),
        "dec_w_hh": u(ks[8], (H, 3 * H)),
        "dec_b_ih": u(ks[9], (1, 3 * H)),
        "dec_b_hh": u(ks[10], (1, 3 * H)),
        # Linear(cat(output, context, embedded)) split along its input axis,
        # output vocab zero-padded to VP lanes.
        "dec_lin_w_h": pad_cols(u(ks[11], (H, de_vocab)), VP),
        "dec_lin_w_c": pad_cols(u(ks[12], (H, de_vocab)), VP),
        "dec_lin_w_e": pad_cols(u(ks[13], (E, de_vocab)), VP),
        "dec_lin_b": pad_cols(u(ks[14], (1, de_vocab)), VP),
    }


# ----------------------------------------------------------------------------
# Full Seq2Seq forward (jitted)
# ----------------------------------------------------------------------------

@functools.partial(jax.jit, static_argnames=("de_vocab",))
def seq2seq_forward(params, src, trg, tf_mask, *, de_vocab):
    """src: [src_len, B], trg: [trg_len, B], tf_mask: [trg_len-1] int32
       -> outputs [trg_len, B, de_vocab] (row 0 is zeros, like the reference)."""
    src_len, B = src.shape
    trg_len, _ = trg.shape
    VP = params["dec_emb"].shape[0]

    BP = _round_up(B, 8)
    src_p = jnp.pad(src, ((0, 0), (0, BP - B)))
    trg_p = jnp.pad(trg, ((0, 0), (0, BP - B)))

    # Encoder (nn.Dropout in eval mode == identity).
    embedded = jnp.take(params["enc_emb"], src_p, axis=0)          # [src_len, BP, E]
    context = encoder_forward(params, embedded)                    # [BP, H]

    # Decoder: fused over steps t = 1 .. trg_len-1.
    trg_onehot = jax.nn.one_hot(trg_p[: trg_len - 1], VP, dtype=jnp.float32)
    logits = decoder_forward(params, tf_mask, trg_onehot, context, de_vocab)

    logits = logits[:, :B, :de_vocab]
    zero = jnp.zeros((1, B, de_vocab), jnp.float32)
    return jnp.concatenate([zero, logits], axis=0)


# ----------------------------------------------------------------------------
# Main
# ----------------------------------------------------------------------------

if __name__ == "__main__":
    EN_VOCAB = 50
    DE_VOCAB = 40
    EMBED_DIM = 128      # lane-aligned (spec uses 128)
    HIDDEN_DIM = 128     # lane-aligned small stand-in for the spec's 254
    SRC_LEN = 7
    TRG_LEN = 5
    BATCH = 2
    TEACHER_FORCING_RATIO = 0.5

    key = jax.random.PRNGKey(0)
    k_params, k_src, k_trg = jax.random.split(key, 3)

    params = init_params(k_params, EN_VOCAB, DE_VOCAB, EMBED_DIM, HIDDEN_DIM)
    src = jax.random.randint(k_src, (SRC_LEN, BATCH), 0, EN_VOCAB, dtype=jnp.int32)
    trg = jax.random.randint(k_trg, (TRG_LEN, BATCH), 0, DE_VOCAB, dtype=jnp.int32)

    # Teacher-forcing decisions mirror the torch module's host-side RNG usage:
    # one random.random() draw per decode step t = 1..trg_len-1; the draw at
    # step t selects the input for step t+1 (step 1 always starts from trg[0]).
    random.seed(0)
    tf_list = [1]
    for t in range(1, TRG_LEN):
        force = random.random() < TEACHER_FORCING_RATIO
        if t < TRG_LEN - 1:
            tf_list.append(1 if force else 0)
    tf_mask = jnp.asarray(tf_list, dtype=jnp.int32)     # [TRG_LEN - 1]

    outputs = seq2seq_forward(params, src, trg, tf_mask, de_vocab=DE_VOCAB)
    outputs = jax.block_until_ready(outputs)

    assert outputs.shape == (TRG_LEN, BATCH, DE_VOCAB)
    assert bool(jnp.all(jnp.isfinite(outputs)))
    print("KERNEL_OK")
</pallas_src>

<mosaic_0001>
module attributes {stable_mosaic.version = 11 : i64} {
  func.func @_encoder_kernel(%arg0: i32, %arg1: memref<1x8x128xf32, #tpu.memory_space<vmem>>, %arg2: memref<128x384xf32, #tpu.memory_space<vmem>>, %arg3: memref<128x384xf32, #tpu.memory_space<vmem>>, %arg4: memref<1x384xf32, #tpu.memory_space<vmem>>, %arg5: memref<1x384xf32, #tpu.memory_space<vmem>>, %arg6: memref<8x128xf32, #tpu.memory_space<vmem>>, %arg7: memref<8x128xf32, #tpu.memory_space<vmem>>) attributes {dimension_semantics = [#tpu.dimension_semantics<arbitrary>], iteration_bounds = array<i64: 7>, scalar_prefetch = 0 : i64, scratch_operands = 1 : i64, tpu.core_type = #tpu.core_type<tc>, window_params = [{transform_indices = @transform_0, window_bounds = array<i64: 1, 8, 128>}, {pipeline_mode = #tpu.pipeline_mode<synchronous>, transform_indices = @transform_1, window_bounds = array<i64: 128, 384>}, {pipeline_mode = #tpu.pipeline_mode<synchronous>, transform_indices = @transform_2, window_bounds = array<i64: 128, 384>}, {pipeline_mode = #tpu.pipeline_mode<synchronous>, transform_indices = @transform_3, window_bounds = array<i64: 1, 384>}, {pipeline_mode = #tpu.pipeline_mode<synchronous>, transform_indices = @transform_4, window_bounds = array<i64: 1, 384>}, {pipeline_mode = #tpu.pipeline_mode<synchronous>, transform_indices = @transform_5, window_bounds = array<i64: 8, 128>}]} {
    %c0_i32 = arith.constant 0 : i32
    %0 = arith.cmpi eq, %arg0, %c0_i32 : i32
    %1 = arith.extui %0 : i1 to i32
    %c0_i32_0 = arith.constant 0 : i32
    %2 = arith.cmpi ne, %1, %c0_i32_0 : i32
    scf.if %2 {
      %cst_21 = arith.constant 0.000000e+00 : f32
      %44 = vector.broadcast %cst_21 : f32 to vector<8x128xf32>
      %c0_22 = arith.constant 0 : index
      %c0_23 = arith.constant 0 : index
      %45 = vector.load %arg7[%c0_22, %c0_23] : memref<8x128xf32, #tpu.memory_space<vmem>>, vector<8x128xf32>
      tpu.vector_store %arg7[%c0_22, %c0_23], %44 {strides = array<i32>} : memref<8x128xf32, #tpu.memory_space<vmem>>, vector<8x128xf32>,
    } else {
    }
    %c0 = arith.constant 0 : index
    %c0_1 = arith.constant 0 : index
    %c0_2 = arith.constant 0 : index
    %3 = vector.load %arg1[%c0, %c0_1, %c0_2] : memref<1x8x128xf32, #tpu.memory_space<vmem>>, vector<1x8x128xf32>
    %4 = vector.shape_cast %3 : vector<1x8x128xf32> to vector<8x128xf32>
    %c0_3 = arith.constant 0 : index
    %c0_4 = arith.constant 0 : index
    %5 = vector.load %arg7[%c0_3, %c0_4] : memref<8x128xf32, #tpu.memory_space<vmem>>, vector<8x128xf32>
    %c0_5 = arith.constant 0 : index
    %c0_6 = arith.constant 0 : index
    %6 = vector.load %arg2[%c0_5, %c0_6] : memref<128x384xf32, #tpu.memory_space<vmem>>, vector<128x384xf32>
    %cst = arith.constant dense<0.000000e+00> : vector<8x384xf32>
    %7 = tpu.matmul %4, %6, %cst {dimension_numbers = #tpu.dot_dimension_numbers<[1], [0], [0], [1], [0, 0, 1, 1], [], []>} : vector<8x128xf32>, vector<128x384xf32>, vector<8x384xf32> -> vector<8x384xf32>
    %c0_7 = arith.constant 0 : index
    %c0_8 = arith.constant 0 : index
    %8 = vector.load %arg4[%c0_7, %c0_8] : memref<1x384xf32, #tpu.memory_space<vmem>>, vector<1x384xf32>
    %9 = vector.broadcast %8 : vector<1x384xf32> to vector<8x384xf32>
    %10 = arith.addf %7, %9 : vector<8x384xf32>
    %c0_9 = arith.constant 0 : index
    %c0_10 = arith.constant 0 : index
    %11 = vector.load %arg3[%c0_9, %c0_10] : memref<128x384xf32, #tpu.memory_space<vmem>>, vector<128x384xf32>
    %cst_11 = arith.constant dense<0.000000e+00> : vector<8x384xf32>
    %12 = tpu.matmul %5, %11, %cst_11 {dimension_numbers = #tpu.dot_dimension_numbers<[1], [0], [0], [1], [0, 0, 1, 1], [], []>} : vector<8x128xf32>, vector<128x384xf32>, vector<8x384xf32> -> vector<8x384xf32>
    %c0_12 = arith.constant 0 : index
    %c0_13 = arith.constant 0 : index
    %13 = vector.load %arg5[%c0_12, %c0_13] : memref<1x384xf32, #tpu.memory_space<vmem>>, vector<1x384xf32>
    %14 = vector.broadcast %13 : vector<1x384xf32> to vector<8x384xf32>
    %15 = arith.addf %12, %14 : vector<8x384xf32>
    %16 = vector.extract_strided_slice %10 {offsets = [0, 0], sizes = [8, 128], strides = [1, 1]} : vector<8x384xf32> to vector<8x128xf32>
    %17 = vector.extract_strided_slice %15 {offsets = [0, 0], sizes = [8, 128], strides = [1, 1]} : vector<8x384xf32> to vector<8x128xf32>
    %18 = arith.addf %16, %17 : vector<8x128xf32>
    %19 = arith.negf %18 : vector<8x128xf32>
    %20 = math.exp %19 : vector<8x128xf32>
    %cst_14 = arith.constant 1.000000e+00 : f32
    %21 = vector.broadcast %cst_14 : f32 to vector<8x128xf32>
    %22 = arith.addf %21, %20 : vector<8x128xf32>
    %23 = arith.divf %21, %22 : vector<8x128xf32>
    %24 = vector.extract_strided_slice %10 {offsets = [0, 128], sizes = [8, 128], strides = [1, 1]} : vector<8x384xf32> to vector<8x128xf32>
    %25 = vector.extract_strided_slice %15 {offsets = [0, 128], sizes = [8, 128], strides = [1, 1]} : vector<8x384xf32> to vector<8x128xf32>
    %26 = arith.addf %24, %25 : vector<8x128xf32>
    %27 = arith.negf %26 : vector<8x128xf32>
    %28 = math.exp %27 : vector<8x128xf32>
    %cst_15 = arith.constant 1.000000e+00 : f32
    %29 = vector.broadcast %cst_15 : f32 to vector<8x128xf32>
    %30 = arith.addf %29, %28 : vector<8x128xf32>
    %31 = arith.divf %29, %30 : vector<8x128xf32>
    %32 = vector.extract_strided_slice %10 {offsets = [0, 256], sizes = [8, 128], strides = [1, 1]} : vector<8x384xf32> to vector<8x128xf32>
    %33 = vector.extract_strided_slice %15 {offsets = [0, 256], sizes = [8, 128], strides = [1, 1]} : vector<8x384xf32> to vector<8x128xf32>
    %34 = arith.mulf %23, %33 : vector<8x128xf32>
    %35 = arith.addf %32, %34 : vector<8x128xf32>
    %36 = math.tanh %35 : vector<8x128xf32>
    %cst_16 = arith.constant 1.000000e+00 : f32
    %37 = vector.broadcast %cst_16 : f32 to vector<8x128xf32>
    %38 = arith.subf %37, %31 : vector<8x128xf32>
    %39 = arith.mulf %38, %36 : vector<8x128xf32>
    %40 = arith.mulf %31, %5 : vector<8x128xf32>
    %41 = arith.addf %39, %40 : vector<8x128xf32>
    %c0_17 = arith.constant 0 : index
    %c0_18 = arith.constant 0 : index
    %42 = vector.load %arg7[%c0_17, %c0_18] : memref<8x128xf32, #tpu.memory_space<vmem>>, vector<8x128xf32>
    tpu.vector_store %arg7[%c0_17, %c0_18], %41 {strides = array<i32>} : memref<8x128xf32, #tpu.memory_space<vmem>>, vector<8x128xf32>,
    %c0_19 = arith.constant 0 : index
    %c0_20 = arith.constant 0 : index
    %43 = vector.load %arg6[%c0_19, %c0_20] : memref<8x128xf32, #tpu.memory_space<vmem>>, vector<8x128xf32>
    tpu.vector_store %arg6[%c0_19, %c0_20], %41 {strides = array<i32>} : memref<8x128xf32, #tpu.memory_space<vmem>>, vector<8x128xf32>,
    return
  }
  func.func @transform_0(%arg0: i32) -> (i32, i32, i32) {
    %c0_i32 = arith.constant 0 : i32
    %c0_i32_0 = arith.constant 0 : i32
    %c0_i32_1 = arith.constant 0 : i32
    return %arg0, %c0_i32, %c0_i32_0 : i32, i32, i32
  }
  func.func @transform_1(%arg0: i32) -> (i32, i32) {
    %c0_i32 = arith.constant 0 : i32
    %c0_i32_0 = arith.constant 0 : i32
    %c0_i32_1 = arith.constant 0 : i32
    return %c0_i32, %c0_i32_0 : i32, i32
  }
  func.func @transform_2(%arg0: i32) -> (i32, i32) {
    %c0_i32 = arith.constant 0 : i32
    %c0_i32_0 = arith.constant 0 : i32
    %c0_i32_1 = arith.constant 0 : i32
    return %c0_i32, %c0_i32_0 : i32, i32
  }
  func.func @transform_3(%arg0: i32) -> (i32, i32) {
    %c0_i32 = arith.constant 0 : i32
    %c0_i32_0 = arith.constant 0 : i32
    %c0_i32_1 = arith.constant 0 : i32
    return %c0_i32, %c0_i32_0 : i32, i32
  }
  func.func @transform_4(%arg0: i32) -> (i32, i32) {
    %c0_i32 = arith.constant 0 : i32
    %c0_i32_0 = arith.constant 0 : i32
    %c0_i32_1 = arith.constant 0 : i32
    return %c0_i32, %c0_i32_0 : i32, i32
  }
  func.func @transform_5(%arg0: i32) -> (i32, i32) {
    %c0_i32 = arith.constant 0 : i32
    %c0_i32_0 = arith.constant 0 : i32
    %c0_i32_1 = arith.constant 0 : i32
    return %c0_i32, %c0_i32_0 : i32, i32
  }
}

module attributes {stable_mosaic.version = 11 : i64} {
  func.func @kernel(%arg0: i32, %arg1: memref<4xi32, #tpu.memory_space<smem>>, %arg2: memref<1x8x128xf32, #tpu.memory_space<vmem>>, %arg3: memref<8x128xf32, #tpu.memory_space<vmem>>, %arg4: memref<128x128xf32, #tpu.memory_space<vmem>>, %arg5: memref<128x384xf32, #tpu.memory_space<vmem>>, %arg6: memref<128x384xf32, #tpu.memory_space<vmem>>, %arg7: memref<128x384xf32, #tpu.memory_space<vmem>>, %arg8: memref<1x384xf32, #tpu.memory_space<vmem>>, %arg9: memref<1x384xf32, #tpu.memory_space<vmem>>, %arg10: memref<128x128xf32, #tpu.memory_space<vmem>>, %arg11: memref<128x128xf32, #tpu.memory_space<vmem>>, %arg12: memref<128x128xf32, #tpu.memory_space<vmem>>, %arg13: memref<1x128xf32, #tpu.memory_space<vmem>>, %arg14: memref<1x8x128xf32, #tpu.memory_space<vmem>>, %arg15: memref<8x128xf32, #tpu.memory_space<vmem>>, %arg16: memref<8x128xf32, #tpu.memory_space<vmem>>, %arg17: memref<8x384xf32, #tpu.memory_space<vmem>>, %arg18: memref<8x128xf32, #tpu.memory_space<vmem>>) attributes {dimension_semantics = [#tpu.dimension_semantics<arbitrary>], iteration_bounds = array<i64: 4>, scalar_prefetch = 1 : i64, scratch_operands = 4 : i64, tpu.core_type = #tpu.core_type<tc>, window_params = [{transform_indices = @transform_0, window_bounds = array<i64: 1, 8, 128>}, {pipeline_mode = #tpu.pipeline_mode<synchronous>, transform_indices = @transform_1, window_bounds = array<i64: 8, 128>}, {pipeline_mode = #tpu.pipeline_mode<synchronous>, transform_indices = @transform_2, window_bounds = array<i64: 128, 128>}, {pipeline_mode = #tpu.pipeline_mode<synchronous>, transform_indices = @transform_3, window_bounds = array<i64: 128, 384>}, {pipeline_mode = #tpu.pipeline_mode<synchronous>, transform_indices = @transform_4, window_bounds = array<i64: 128, 384>}, {pipeline_mode = #tpu.pipeline_mode<synchronous>, transform_indices = @transform_5, window_bounds = array<i64: 128, 384>}, {pipeline_mode = #tpu.pipeline_mode<synchronous>, transform_indices = @transform_6, window_bounds = array<i64: 1, 384>}, {pipeline_mode = #tpu.pipeline_mode<synchronous>, transform_indices = @transform_7, window_bounds = array<i64: 1, 384>}, {pipeline_mode = #tpu.pipeline_mode<synchronous>, transform_indices = @transform_8, window_bounds = array<i64: 128, 128>}, {pipeline_mode = #tpu.pipeline_mode<synchronous>, transform_indices = @transform_9, window_bounds = array<i64: 128, 128>}, {pipeline_mode = #tpu.pipeline_mode<synchronous>, transform_indices = @transform_10, window_bounds = array<i64: 128, 128>}, {pipeline_mode = #tpu.pipeline_mode<synchronous>, transform_indices = @transform_11, window_bounds = array<i64: 1, 128>}, {transform_indices = @transform_12, window_bounds = array<i64: 1, 8, 128>}]} {
    %c0_i32 = arith.constant 0 : i32
    %0 = arith.cmpi eq, %arg0, %c0_i32 : i32
    %1 = arith.extui %0 : i1 to i32
    %c0_i32_0 = arith.constant 0 : i32
    %2 = arith.cmpi ne, %1, %c0_i32_0 : i32
    scf.if %2 {
      %c0_41 = arith.constant 0 : index
      %c0_42 = arith.constant 0 : index
      %84 = vector.load %arg3[%c0_41, %c0_42] : memref<8x128xf32, #tpu.memory_space<vmem>>, vector<8x128xf32>
      %c0_43 = arith.constant 0 : index
      %c0_44 = arith.constant 0 : index
      %85 = vector.load %arg15[%c0_43, %c0_44] : memref<8x128xf32, #tpu.memory_space<vmem>>, vector<8x128xf32>
      tpu.vector_store %arg15[%c0_43, %c0_44], %84 {strides = array<i32>} : memref<8x128xf32, #tpu.memory_space<vmem>>, vector<8x128xf32>,
      %cst_45 = arith.constant 0.000000e+00 : f32
      %86 = vector.broadcast %cst_45 : f32 to vector<8x128xf32>
      %c0_46 = arith.constant 0 : index
      %c0_47 = arith.constant 0 : index
      %87 = vector.load %arg16[%c0_46, %c0_47] : memref<8x128xf32, #tpu.memory_space<vmem>>, vector<8x128xf32>
      tpu.vector_store %arg16[%c0_46, %c0_47], %86 {strides = array<i32>} : memref<8x128xf32, #tpu.memory_space<vmem>>, vector<8x128xf32>,
      %c0_48 = arith.constant 0 : index
      %c0_49 = arith.constant 0 : index
      %88 = vector.load %arg6[%c0_48, %c0_49] : memref<128x384xf32, #tpu.memory_space<vmem>>, vector<128x384xf32>
      %cst_50 = arith.constant dense<0.000000e+00> : vector<8x384xf32>
      %89 = tpu.matmul %84, %88, %cst_50 {dimension_numbers = #tpu.dot_dimension_numbers<[1], [0], [0], [1], [0, 0, 1, 1], [], []>} : vector<8x128xf32>, vector<128x384xf32>, vector<8x384xf32> -> vector<8x384xf32>
      %c0_51 = arith.constant 0 : index
      %c0_52 = arith.constant 0 : index
      %90 = vector.load %arg8[%c0_51, %c0_52] : memref<1x384xf32, #tpu.memory_space<vmem>>, vector<1x384xf32>
      %91 = vector.broadcast %90 : vector<1x384xf32> to vector<8x384xf32>
      %92 = arith.addf %89, %91 : vector<8x384xf32>
      %c0_53 = arith.constant 0 : index
      %c0_54 = arith.constant 0 : index
      %93 = vector.load %arg17[%c0_53, %c0_54] : memref<8x384xf32, #tpu.memory_space<vmem>>, vector<8x384xf32>
      tpu.vector_store %arg17[%c0_53, %c0_54], %92 {strides = array<i32>} : memref<8x384xf32, #tpu.memory_space<vmem>>, vector<8x384xf32>,
      %c0_55 = arith.constant 0 : index
      %c0_56 = arith.constant 0 : index
      %94 = vector.load %arg11[%c0_55, %c0_56] : memref<128x128xf32, #tpu.memory_space<vmem>>, vector<128x128xf32>
      %cst_57 = arith.constant dense<0.000000e+00> : vector<8x128xf32>
      %95 = tpu.matmul %84, %94, %cst_57 {dimension_numbers = #tpu.dot_dimension_numbers<[1], [0], [0], [1], [0, 0, 1, 1], [], []>} : vector<8x128xf32>, vector<128x128xf32>, vector<8x128xf32> -> vector<8x128xf32>
      %c0_58 = arith.constant 0 : index
      %c0_59 = arith.constant 0 : index
      %96 = vector.load %arg13[%c0_58, %c0_59] : memref<1x128xf32, #tpu.memory_space<vmem>>, vector<1x128xf32>
      %97 = vector.broadcast %96 : vector<1x128xf32> to vector<8x128xf32>
      %98 = arith.addf %95, %97 : vector<8x128xf32>
      %c0_60 = arith.constant 0 : index
      %c0_61 = arith.constant 0 : index
      %99 = vector.load %arg18[%c0_60, %c0_61] : memref<8x128xf32, #tpu.memory_space<vmem>>, vector<8x128xf32>
      tpu.vector_store %arg18[%c0_60, %c0_61], %98 {strides = array<i32>} : memref<8x128xf32, #tpu.memory_space<vmem>>, vector<8x128xf32>,
    } else {
    }
    %3 = arith.index_cast %arg0 : i32 to index
    %4 = memref.load %arg1[%3] : memref<4xi32, #tpu.memory_space<smem>>
    %c1_i32 = arith.constant 1 : i32
    %5 = arith.cmpi eq, %4, %c1_i32 : i32
    %6 = arith.extui %5 : i1 to i32
    %7 = arith.sitofp %6 : i32 to f32
    %c0 = arith.constant 0 : index
    %c0_1 = arith.constant 0 : index
    %c0_2 = arith.constant 0 : index
    %8 = vector.load %arg2[%c0, %c0_1, %c0_2] : memref<1x8x128xf32, #tpu.memory_space<vmem>>, vector<1x8x128xf32>
    %9 = vector.shape_cast %8 : vector<1x8x128xf32> to vector<8x128xf32>
    %10 = vector.broadcast %7 : f32 to vector<8x128xf32>
    %11 = arith.mulf %10, %9 : vector<8x128xf32>
    %cst = arith.constant 1.000000e+00 : f32
    %12 = arith.subf %cst, %7 : f32
    %c0_3 = arith.constant 0 : index
    %c0_4 = arith.constant 0 : index
    %13 = vector.load %arg16[%c0_3, %c0_4] : memref<8x128xf32, #tpu.memory_space<vmem>>, vector<8x128xf32>
    %14 = vector.broadcast %12 : f32 to vector<8x128xf32>
    %15 = arith.mulf %14, %13 : vector<8x128xf32>
    %16 = arith.addf %11, %15 : vector<8x128xf32>
    %c0_5 = arith.constant 0 : index
    %c0_6 = arith.constant 0 : index
    %17 = vector.load %arg4[%c0_5, %c0_6] : memref<128x128xf32, #tpu.memory_space<vmem>>, vector<128x128xf32>
    %cst_7 = arith.constant dense<0.000000e+00> : vector<8x128xf32>
    %18 = tpu.matmul %16, %17, %cst_7 {dimension_numbers = #tpu.dot_dimension_numbers<[1], [0], [0], [1], [0, 0, 1, 1], [], []>} : vector<8x128xf32>, vector<128x128xf32>, vector<8x128xf32> -> vector<8x128xf32>
    %c0_8 = arith.constant 0 : index
    %c0_9 = arith.constant 0 : index
    %19 = vector.load %arg15[%c0_8, %c0_9] : memref<8x128xf32, #tpu.memory_space<vmem>>, vector<8x128xf32>
    %c0_10 = arith.constant 0 : index
    %c0_11 = arith.constant 0 : index
    %20 = vector.load %arg5[%c0_10, %c0_11] : memref<128x384xf32, #tpu.memory_space<vmem>>, vector<128x384xf32>
    %cst_12 = arith.constant dense<0.000000e+00> : vector<8x384xf32>
    %21 = tpu.matmul %18, %20, %cst_12 {dimension_numbers = #tpu.dot_dimension_numbers<[1], [0], [0], [1], [0, 0, 1, 1], [], []>} : vector<8x128xf32>, vector<128x384xf32>, vector<8x384xf32> -> vector<8x384xf32>
    %c0_13 = arith.constant 0 : index
    %c0_14 = arith.constant 0 : index
    %22 = vector.load %arg17[%c0_13, %c0_14] : memref<8x384xf32, #tpu.memory_space<vmem>>, vector<8x384xf32>
    %23 = arith.addf %21, %22 : vector<8x384xf32>
    %c0_15 = arith.constant 0 : index
    %c0_16 = arith.constant 0 : index
    %24 = vector.load %arg7[%c0_15, %c0_16] : memref<128x384xf32, #tpu.memory_space<vmem>>, vector<128x384xf32>
    %cst_17 = arith.constant dense<0.000000e+00> : vector<8x384xf32>
    %25 = tpu.matmul %19, %24, %cst_17 {dimension_numbers = #tpu.dot_dimension_numbers<[1], [0], [0], [1], [0, 0, 1, 1], [], []>} : vector<8x128xf32>, vector<128x384xf32>, vector<8x384xf32> -> vector<8x384xf32>
    %c0_18 = arith.constant 0 : index
    %c0_19 = arith.constant 0 : index
    %26 = vector.load %arg9[%c0_18, %c0_19] : memref<1x384xf32, #tpu.memory_space<vmem>>, vector<1x384xf32>
    %27 = vector.broadcast %26 : vector<1x384xf32> to vector<8x384xf32>
    %28 = arith.addf %25, %27 : vector<8x384xf32>
    %29 = vector.extract_strided_slice %23 {offsets = [0, 0], sizes = [8, 128], strides = [1, 1]} : vector<8x384xf32> to vector<8x128xf32>
    %30 = vector.extract_strided_slice %28 {offsets = [0, 0], sizes = [8, 128], strides = [1, 1]} : vector<8x384xf32> to vector<8x128xf32>
    %31 = arith.addf %29, %30 : vector<8x128xf32>
    %32 = arith.negf %31 : vector<8x128xf32>
    %33 = math.exp %32 : vector<8x128xf32>
    %cst_20 = arith.constant 1.000000e+00 : f32
    %34 = vector.broadcast %cst_20 : f32 to vector<8x128xf32>
    %35 = arith.addf %34, %33 : vector<8x128xf32>
    %36 = arith.divf %34, %35 : vector<8x128xf32>
    %37 = vector.extract_strided_slice %23 {offsets = [0, 128], sizes = [8, 128], strides = [1, 1]} : vector<8x384xf32> to vector<8x128xf32>
    %38 = vector.extract_strided_slice %28 {offsets = [0, 128], sizes = [8, 128], strides = [1, 1]} : vector<8x384xf32> to vector<8x128xf32>
    %39 = arith.addf %37, %38 : vector<8x128xf32>
    %40 = arith.negf %39 : vector<8x128xf32>
    %41 = math.exp %40 : vector<8x128xf32>
    %cst_21 = arith.constant 1.000000e+00 : f32
    %42 = vector.broadcast %cst_21 : f32 to vector<8x128xf32>
    %43 = arith.addf %42, %41 : vector<8x128xf32>
    %44 = arith.divf %42, %43 : vector<8x128xf32>
    %45 = vector.extract_strided_slice %23 {offsets = [0, 256], sizes = [8, 128], strides = [1, 1]} : vector<8x384xf32> to vector<8x128xf32>
    %46 = vector.extract_strided_slice %28 {offsets = [0, 256], sizes = [8, 128], strides = [1, 1]} : vector<8x384xf32> to vector<8x128xf32>
    %47 = arith.mulf %36, %46 : vector<8x128xf32>
    %48 = arith.addf %45, %47 : vector<8x128xf32>
    %49 = math.tanh %48 : vector<8x128xf32>
    %cst_22 = arith.constant 1.000000e+00 : f32
    %50 = vector.broadcast %cst_22 : f32 to vector<8x128xf32>
    %51 = arith.subf %50, %44 : vector<8x128xf32>
    %52 = arith.mulf %51, %49 : vector<8x128xf32>
    %53 = arith.mulf %44, %19 : vector<8x128xf32>
    %54 = arith.addf %52, %53 : vector<8x128xf32>
    %c0_23 = arith.constant 0 : index
    %c0_24 = arith.constant 0 : index
    %55 = vector.load %arg15[%c0_23, %c0_24] : memref<8x128xf32, #tpu.memory_space<vmem>>, vector<8x128xf32>
    tpu.vector_store %arg15[%c0_23, %c0_24], %54 {strides = array<i32>} : memref<8x128xf32, #tpu.memory_space<vmem>>, vector<8x128xf32>,
    %c0_25 = arith.constant 0 : index
    %c0_26 = arith.constant 0 : index
    %56 = vector.load %arg10[%c0_25, %c0_26] : memref<128x128xf32, #tpu.memory_space<vmem>>, vector<128x128xf32>
    %cst_27 = arith.constant dense<0.000000e+00> : vector<8x128xf32>
    %57 = tpu.matmul %54, %56, %cst_27 {dimension_numbers = #tpu.dot_dimension_numbers<[1], [0], [0], [1], [0, 0, 1, 1], [], []>} : vector<8x128xf32>, vector<128x128xf32>, vector<8x128xf32> -> vector<8x128xf32>
    %c0_28 = arith.constant 0 : index
    %c0_29 = arith.constant 0 : index
    %58 = vector.load %arg12[%c0_28, %c0_29] : memref<128x128xf32, #tpu.memory_space<vmem>>, vector<128x128xf32>
    %cst_30 = arith.constant dense<0.000000e+00> : vector<8x128xf32>
    %59 = tpu.matmul %18, %58, %cst_30 {dimension_numbers = #tpu.dot_dimension_numbers<[1], [0], [0], [1], [0, 0, 1, 1], [], []>} : vector<8x128xf32>, vector<128x128xf32>, vector<8x128xf32> -> vector<8x128xf32>
    %60 = arith.addf %57, %59 : vector<8x128xf32>
    %c0_31 = arith.constant 0 : index
    %c0_32 = arith.constant 0 : index
    %61 = vector.load %arg18[%c0_31, %c0_32] : memref<8x128xf32, #tpu.memory_space<vmem>>, vector<8x128xf32>
    %62 = arith.addf %60, %61 : vector<8x128xf32>
    %c0_33 = arith.constant 0 : index
    %c0_34 = arith.constant 0 : index
    %c0_35 = arith.constant 0 : index
    %63 = vector.load %arg14[%c0_33, %c0_34, %c0_35] : memref<1x8x128xf32, #tpu.memory_space<vmem>>, vector<1x8x128xf32>
    %64 = vector.shape_cast %63 : vector<1x8x128xf32> to vector<8x128xf32>
    %65 = vector.shape_cast %62 : vector<8x128xf32> to vector<1x8x128xf32>
    tpu.vector_store %arg14[%c0_33, %c0_34, %c0_35], %65 {strides = array<i32>} : memref<1x8x128xf32, #tpu.memory_space<vmem>>, vector<1x8x128xf32>,
    %66 = tpu.iota {dimensions = array<i32: 1>} : vector<8x128xi32>
    %c40_i32 = arith.constant 40 : i32
    %67 = vector.broadcast %c40_i32 : i32 to vector<8x128xi32>
    %68 = arith.cmpi slt, %66, %67 : vector<8x128xi32>
    %cst_36 = arith.constant -1.000000e+30 : f32
    %69 = vector.broadcast %cst_36 : f32 to vector<8x128xf32>
    %70 = arith.select %68, %62, %69 : vector<8x128xi1>, vector<8x128xf32>
    %cst_37 = arith.constant dense<0xFF800000> : vector<8xf32>
    %71 = vector.multi_reduction <maximumf>, %70, %cst_37 [1] : vector<8x128xf32> to vector<8xf32>
    %72 = vector.shape_cast %71 : vector<8xf32> to vector<8x1xf32>
    %73 = vector.broadcast %72 : vector<8x1xf32> to vector<8x128xf32>
    %74 = arith.cmpf oeq, %70, %73 : vector<8x128xf32>
    %c128_i32 = arith.constant 128 : i32
    %75 = vector.broadcast %c128_i32 : i32 to vector<8x128xi32>
    %76 = arith.select %74, %66, %75 : vector<8x128xi1>, vector<8x128xi32>
    %cst_38 = arith.constant dense<2147483647> : vector<8xi32>
    %77 = vector.multi_reduction <minsi>, %76, %cst_38 [1] : vector<8x128xi32> to vector<8xi32>
    %78 = vector.shape_cast %77 : vector<8xi32> to vector<8x1xi32>
    %79 = vector.broadcast %78 : vector<8x1xi32> to vector<8x128xi32>
    %80 = arith.cmpi eq, %66, %79 : vector<8x128xi32>
    %81 = arith.extui %80 : vector<8x128xi1> to vector<8x128xi32>
    %82 = arith.sitofp %81 : vector<8x128xi32> to vector<8x128xf32>
    %c0_39 = arith.constant 0 : index
    %c0_40 = arith.constant 0 : index
    %83 = vector.load %arg16[%c0_39, %c0_40] : memref<8x128xf32, #tpu.memory_space<vmem>>, vector<8x128xf32>
    tpu.vector_store %arg16[%c0_39, %c0_40], %82 {strides = array<i32>} : memref<8x128xf32, #tpu.memory_space<vmem>>, vector<8x128xf32>,
    return
  }
  func.func @transform_0(%arg0: i32, %arg1: memref<4xi32, #tpu.memory_space<smem>>) -> (i32, i32, i32) {
    %c0_i32 = arith.constant 0 : i32
    %c0_i32_0 = arith.constant 0 : i32
    %c0_i32_1 = arith.constant 0 : i32
    return %arg0, %c0_i32, %c0_i32_0 : i32, i32, i32
  }
  func.func @transform_1(%arg0: i32, %arg1: memref<4xi32, #tpu.memory_space<smem>>) -> (i32, i32) {
    %c0_i32 = arith.constant 0 : i32
    %c0_i32_0 = arith.constant 0 : i32
    %c0_i32_1 = arith.constant 0 : i32
    return %c0_i32, %c0_i32_0 : i32, i32
  }
  func.func @transform_2(%arg0: i32, %arg1: memref<4xi32, #tpu.memory_space<smem>>) -> (i32, i32) {
    %c0_i32 = arith.constant 0 : i32
    %c0_i32_0 = arith.constant 0 : i32
    %c0_i32_1 = arith.constant 0 : i32
    return %c0_i32, %c0_i32_0 : i32, i32
  }
  func.func @transform_3(%arg0: i32, %arg1: memref<4xi32, #tpu.memory_space<smem>>) -> (i32, i32) {
    %c0_i32 = arith.constant 0 : i32
    %c0_i32_0 = arith.constant 0 : i32
    %c0_i32_1 = arith.constant 0 : i32
    return %c0_i32, %c0_i32_0 : i32, i32
  }
  func.func @transform_4(%arg0: i32, %arg1: memref<4xi32, #tpu.memory_space<smem>>) -> (i32, i32) {
    %c0_i32 = arith.constant 0 : i32
    %c0_i32_0 = arith.constant 0 : i32
    %c0_i32_1 = arith.constant 0 : i32
    return %c0_i32, %c0_i32_0 : i32, i32
  }
  func.func @transform_5(%arg0: i32, %arg1: memref<4xi32, #tpu.memory_space<smem>>) -> (i32, i32) {
    %c0_i32 = arith.constant 0 : i32
    %c0_i32_0 = arith.constant 0 : i32
    %c0_i32_1 = arith.constant 0 : i32
    return %c0_i32, %c0_i32_0 : i32, i32
  }
  func.func @transform_6(%arg0: i32, %arg1: memref<4xi32, #tpu.memory_space<smem>>) -> (i32, i32) {
    %c0_i32 = arith.constant 0 : i32
    %c0_i32_0 = arith.constant 0 : i32
    %c0_i32_1 = arith.constant 0 : i32
    return %c0_i32, %c0_i32_0 : i32, i32
  }
  func.func @transform_7(%arg0: i32, %arg1: memref<4xi32, #tpu.memory_space<smem>>) -> (i32, i32) {
    %c0_i32 = arith.constant 0 : i32
    %c0_i32_0 = arith.constant 0 : i32
    %c0_i32_1 = arith.constant 0 : i32
    return %c0_i32, %c0_i32_0 : i32, i32
  }
  func.func @transform_8(%arg0: i32, %arg1: memref<4xi32, #tpu.memory_space<smem>>) -> (i32, i32) {
    %c0_i32 = arith.constant 0 : i32
    %c0_i32_0 = arith.constant 0 : i32
    %c0_i32_1 = arith.constant 0 : i32
    return %c0_i32, %c0_i32_0 : i32, i32
  }
  func.func @transform_9(%arg0: i32, %arg1: memref<4xi32, #tpu.memory_space<smem>>) -> (i32, i32) {
    %c0_i32 = arith.constant 0 : i32
    %c0_i32_0 = arith.constant 0 : i32
    %c0_i32_1 = arith.constant 0 : i32
    return %c0_i32, %c0_i32_0 : i32, i32
  }
  func.func @transform_10(%arg0: i32, %arg1: memref<4xi32, #tpu.memory_space<smem>>) -> (i32, i32) {
    %c0_i32 = arith.constant 0 : i32
    %c0_i32_0 = arith.constant 0 : i32
    %c0_i32_1 = arith.constant 0 : i32
    return %c0_i32, %c0_i32_0 : i32, i32
  }
  func.func @transform_11(%arg0: i32, %arg1: memref<4xi32, #tpu.memory_space<smem>>) -> (i32, i32) {
    %c0_i32 = arith.constant 0 : i32
    %c0_i32_0 = arith.constant 0 : i32
    %c0_i32_1 = arith.constant 0 : i32
    return %c0_i32, %c0_i32_0 : i32, i32
  }
  func.func @transform_12(%arg0: i32, %arg1: memref<4xi32, #tpu.memory_space<smem>>) -> (i32, i32, i32) {
    %c0_i32 = arith.constant 0 : i32
    %c0_i32_0 = arith.constant 0 : i32
    %c0_i32_1 = arith.constant 0 : i32
    return %arg0, %c0_i32, %c0_i32_0 : i32, i32, i32
  }
}

</mosaic_0001>

<llo_original>
// kernel: seq2seq_forward.2
$region0: #{seq2seq_forward.2}
  #allocation0 [shape = 'u32[]', space=smem, size = 0x4, offset = 0x4, fixed_abs, tag = 'smem constant byte address 0x4 - core index']
  #allocation1 [shape = 'u32[144,128]{1,0:T(1,128)}', space=vmem, size = 0x12000, scoped, tag = 'internal scratch']
  #allocation2 [shape = 'f32[8,128]{1,0:T(8,128)}', space=vmem, size = 0x1000, scoped, tag = 'scratch operand']
  %s0 = inlined_call_operand.vmem [shape: f32[7,8,128], index: 0, kind: input, shape index: {}]
  %s1 = inlined_call_operand.vmem [shape: f32[128,384], index: 1, kind: input, shape index: {}]
  %s2 = inlined_call_operand.hbm [shape: f32[128,384], index: 2, kind: input, shape index: {}]
  %s3 = inlined_call_operand.vmem [shape: f32[1,384], index: 3, kind: input, shape index: {}]
  %s4 = inlined_call_operand.vmem [shape: f32[1,384], index: 4, kind: input, shape index: {}]
  %s5 = inlined_call_operand.vmem [shape: f32[8,128], index: 5, kind: output, shape index: {}]
  %s6 = sld [smem:[#allocation0]]
  $region61: #{seq2seq_forward.2} parent=0
    _
  %s8 = ssub.s32 1, %s6
  %s9 = scalar_select 0, %s8, %s6
  $region1: #{seq2seq_forward.2} parent=0
    #allocation3 [shape = 'u8[196608]{0}', space=vmem, size = 0x30000, scoped, tag = 'input window, operand 2, single buffered']
    #allocation4 [shape = 's32[2]{0}', space=sflag, size = 0x8, scoped, tag = 'scoped memory for seq2seq_forward.2']
    %10 = vsyncpa [#allocation4], 0
    loop: start=0, step=1, limit=9
    $region2: #{seq2seq_forward.2} parent=1 // loop_pre_header
      _
    $region3: #{seq2seq_forward.2} parent=1 // loop_header
      %s12 = sphi 0, %s16
      %p13 = scmp.ge.s32.totalorder %s12, 9
      %s22 = sphi 0, %s24
      %s25 = sphi 0, %s22
      %s26 = sphi 0, %s25
      %s42 = sphi 0, %s26
      %s46 = sphi 0, %s46
      %s48 = sphi 0, %s46
      %s49 = sphi 0, %s48
      %s63 = sphi 0, %s49
      %s67 = sphi 0, %s67
      %s69 = sphi 0, %s67
      %s70 = sphi 0, %s69
      %s84 = sphi 0, %s70
      %s88 = sphi 0, %s88
      %s90 = sphi 0, %s88
      %s91 = sphi 0, %s90
      %s105 = sphi 0, %s91
      %s109 = sphi 0, %s109
      %s111 = sphi 0, %s109
      %s112 = sphi 0, %s111
      %s126 = sphi 0, %s112
      %s130 = sphi 0, %s130
      %s132 = sphi 0, %s130
      %s133 = sphi 0, %s132
      %s147 = sphi 0, %s133
    $region4: #{seq2seq_forward.2} parent=1 // loop_header_branch
      %15 = sbr.rel (%p13) target = $region8
    $region5: #{seq2seq_forward.2} parent=1 // loop_body
      %s17 = ssub.s32 %s12, 1
      %s18 = ssub.s32 %s12, 2
      %s19 = sadd.s32 %s12, 1
      %s20 = ssub.s32 %s12, %s19
      %p21 = scmp.eq.s32.totalorder %s20, 0
      %s23 = sadd.s32 %s22, 1
      %s24 = scalar_select %p21, %s22, %s23
      %p27 = pneg %p21
      %p28 = scmp.eq.s32.totalorder %s12, 6
      %p29 = por %p27, %p28
      %p30 = scmp.ne.s32.totalorder %s22, %s25
      %p31 = scmp.eq.s32.totalorder %s12, 0
      %p32 = por %p30, %p31
      %p33 = scmp.ne.s32.totalorder %s22, %s25
      %p34 = scmp.eq.s32.totalorder %s17, 6
      %p35 = por %p33, %p34
      %p36 = scmp.ne.s32.totalorder %s25, %s26
      %p37 = scmp.eq.s32.totalorder %s17, 0
      %p38 = por %p36, %p37
      %p39 = scmp.ne.s32.totalorder %s25, %s26
      %p40 = scmp.eq.s32.totalorder %s18, 6
      %p41 = por %p39, %p40
      %p43 = scmp.ne.s32.totalorder %s26, %s42
      %p44 = scmp.eq.s32.totalorder %s18, 0
      %p45 = por %p43, %p44
      %s47 = sadd.s32 %s46, 1
      %p50 = scmp.eq.s32.totalorder %s12, 6
      %p51 = scmp.ne.s32.totalorder %s46, %s48
      %p52 = scmp.eq.s32.totalorder %s12, 0
      %p53 = por %p51, %p52
      %p54 = scmp.ne.s32.totalorder %s46, %s48
      %p55 = scmp.eq.s32.totalorder %s17, 6
      %p56 = por %p54, %p55
      %p57 = scmp.ne.s32.totalorder %s48, %s49
      %p58 = scmp.eq.s32.totalorder %s17, 0
      %p59 = por %p57, %p58
      %p60 = scmp.ne.s32.totalorder %s48, %s49
      %p61 = scmp.eq.s32.totalorder %s18, 6
      %p62 = por %p60, %p61
      %p64 = scmp.ne.s32.totalorder %s49, %s63
      %p65 = scmp.eq.s32.totalorder %s18, 0
      %p66 = por %p64, %p65
      %s68 = sadd.s32 %s67, 1
      %p71 = scmp.eq.s32.totalorder %s12, 6
      %p72 = scmp.ne.s32.totalorder %s67, %s69
      %p73 = scmp.eq.s32.totalorder %s12, 0
      %p74 = por %p72, %p73
      %p75 = scmp.ne.s32.totalorder %s67, %s69
      %p76 = scmp.eq.s32.totalorder %s17, 6
      %p77 = por %p75, %p76
      %p78 = scmp.ne.s32.totalorder %s69, %s70
      %p79 = scmp.eq.s32.totalorder %s17, 0
      %p80 = por %p78, %p79
      %p81 = scmp.ne.s32.totalorder %s69, %s70
      %p82 = scmp.eq.s32.totalorder %s18, 6
      %p83 = por %p81, %p82
      %p85 = scmp.ne.s32.totalorder %s70, %s84
      %p86 = scmp.eq.s32.totalorder %s18, 0
      %p87 = por %p85, %p86
      %s89 = sadd.s32 %s88, 1
      %p92 = scmp.eq.s32.totalorder %s12, 6
      %p93 = scmp.ne.s32.totalorder %s88, %s90
      %p94 = scmp.eq.s32.totalorder %s12, 0
      %p95 = por %p93, %p94
      %p96 = scmp.ne.s32.totalorder %s88, %s90
      %p97 = scmp.eq.s32.totalorder %s17, 6
      %p98 = por %p96, %p97
      %p99 = scmp.ne.s32.totalorder %s90, %s91
      %p100 = scmp.eq.s32.totalorder %s17, 0
      %p101 = por %p99, %p100
      %p102 = scmp.ne.s32.totalorder %s90, %s91
      %p103 = scmp.eq.s32.totalorder %s18, 6
      %p104 = por %p102, %p103
      %p106 = scmp.ne.s32.totalorder %s91, %s105
      %p107 = scmp.eq.s32.totalorder %s18, 0
      %p108 = por %p106, %p107
      %s110 = sadd.s32 %s109, 1
      %p113 = scmp.eq.s32.totalorder %s12, 6
      %p114 = scmp.ne.s32.totalorder %s109, %s111
      %p115 = scmp.eq.s32.totalorder %s12, 0
      %p116 = por %p114, %p115
      %p117 = scmp.ne.s32.totalorder %s109, %s111
      %p118 = scmp.eq.s32.totalorder %s17, 6
      %p119 = por %p117, %p118
      %p120 = scmp.ne.s32.totalorder %s111, %s112
      %p121 = scmp.eq.s32.totalorder %s17, 0
      %p122 = por %p120, %p121
      %p123 = scmp.ne.s32.totalorder %s111, %s112
      %p124 = scmp.eq.s32.totalorder %s18, 6
      %p125 = por %p123, %p124
      %p127 = scmp.ne.s32.totalorder %s112, %s126
      %p128 = scmp.eq.s32.totalorder %s18, 0
      %p129 = por %p127, %p128
      %s131 = sadd.s32 %s130, 1
      %p134 = scmp.eq.s32.totalorder %s12, 6
      %p135 = scmp.ne.s32.totalorder %s130, %s132
      %p136 = scmp.eq.s32.totalorder %s12, 0
      %p137 = por %p135, %p136
      %p138 = scmp.ne.s32.totalorder %s130, %s132
      %p139 = scmp.eq.s32.totalorder %s17, 6
      %p140 = por %p138, %p139
      %p141 = scmp.ne.s32.totalorder %s132, %s133
      %p142 = scmp.eq.s32.totalorder %s17, 0
      %p143 = por %p141, %p142
      %p144 = scmp.ne.s32.totalorder %s132, %s133
      %p145 = scmp.eq.s32.totalorder %s18, 6
      %p146 = por %p144, %p145
      %p148 = scmp.ne.s32.totalorder %s133, %s147
      %p149 = scmp.eq.s32.totalorder %s18, 0
      %p150 = por %p148, %p149
      %p151 = scmp.le.s32.totalorder 1, %s12
      %p152 = scmp.lt.s32.totalorder %s12, 8
      %p153 = pnand %p151, %p152
      %p154 = pneg %p153
      // Predicated region
      $region9: #{seq2seq_forward.2} parent=5 // pred_check
        _
      $region10: #{seq2seq_forward.2} parent=5 // pred_check_branch
        %156 = sbr.rel (%p153) target = $region12
      $region11: #{seq2seq_forward.2} parent=5 // pred_region
        %s157 = ssub.s32 %s12, 1
        // Predicated region
        $region13: #{seq2seq_forward.2} parent=11 // pred_check
          %p158 = pneg %p59
        $region14: #{seq2seq_forward.2} parent=11 // pred_check_branch
          %160 = sbr.rel (%p158) target = $region16
        $region15: #{seq2seq_forward.2} parent=11 // pred_region
          _
        $region16: #{seq2seq_forward.2} parent=11 // pred_fallthru
          _
        // Predicated region
        $region17: #{seq2seq_forward.2} parent=11 // pred_check
          %p161 = pneg %p80
        $region18: #{seq2seq_forward.2} parent=11 // pred_check_branch
          %163 = sbr.rel (%p161) target = $region20
        $region19: #{seq2seq_forward.2} parent=11 // pred_region
          %s165 = ssub.s32 6144, 6144
          %166 = vsyncadd [#allocation4], %s165
          %s167 = sshll.u32 [#allocation3], 4
          %s168 = int_to_ptr.vmem [resolvable:$true] %s167
          %173 = dma.hbm_to_vmem [thread:$0]  %s2, 6144, %s168, [#allocation4], 384, 384, 24
        $region20: #{seq2seq_forward.2} parent=11 // pred_fallthru
          _
        // Predicated region
        $region21: #{seq2seq_forward.2} parent=11 // pred_check
          %p174 = pneg %p101
        $region22: #{seq2seq_forward.2} parent=11 // pred_check_branch
          %176 = sbr.rel (%p174) target = $region24
        $region23: #{seq2seq_forward.2} parent=11 // pred_region
          _
        $region24: #{seq2seq_forward.2} parent=11 // pred_fallthru
          _
        // Predicated region
        $region25: #{seq2seq_forward.2} parent=11 // pred_check
          %p177 = pneg %p122
        $region26: #{seq2seq_forward.2} parent=11 // pred_check_branch
          %179 = sbr.rel (%p177) target = $region28
        $region27: #{seq2seq_forward.2} parent=11 // pred_region
          _
        $region28: #{seq2seq_forward.2} parent=11 // pred_fallthru
          _
      $region12: #{seq2seq_forward.2} parent=5 // pred_fallthru
        _
      %p180 = scmp.lt.s32.totalorder %s12, 7
      // Predicated region
      $region29: #{seq2seq_forward.2} parent=5 // pred_check
        %p181 = pneg %p180
      $region30: #{seq2seq_forward.2} parent=5 // pred_check_branch
        %183 = sbr.rel (%p181) target = $region32
      $region31: #{seq2seq_forward.2} parent=5 // pred_region
        // Predicated region
        $region33: #{seq2seq_forward.2} parent=31 // pred_check
          %p184 = pneg %p32
        $region34: #{seq2seq_forward.2} parent=31 // pred_check_branch
          %186 = sbr.rel (%p184) target = $region36
        $region35: #{seq2seq_forward.2} parent=31 // pred_region
          %p187 = scmp.lt.s32.totalorder %s12, 6
          %s188 = scalar_select %p187, %s12, 6
          %s189 = smul.addr %s188, 8
          %s190 = scalar_lea.vmem %s0, %s189
        $region36: #{seq2seq_forward.2} parent=31 // pred_fallthru
          _
      $region32: #{seq2seq_forward.2} parent=5 // pred_fallthru
        _
      %p191 = scmp.le.s32.totalorder 1, %s12
      %p192 = scmp.lt.s32.totalorder %s12, 8
      %p193 = pnand %p191, %p192
      %p194 = pneg %p193
      // Predicated region
      $region37: #{seq2seq_forward.2} parent=5 // pred_check
        _
      $region38: #{seq2seq_forward.2} parent=5 // pred_check_branch
        %196 = sbr.rel (%p193) target = $region40
      $region39: #{seq2seq_forward.2} parent=5 // pred_region
        %s197 = ssub.s32 %s12, 1
        // Predicated region
        $region41: #{seq2seq_forward.2} parent=39 // pred_check
          %p198 = pneg %p80
        $region42: #{seq2seq_forward.2} parent=39 // pred_check_branch
          %200 = sbr.rel (%p198) target = $region44
        $region43: #{seq2seq_forward.2} parent=39 // pred_region
          %201 = dma.done [#allocation4], 6144
        $region44: #{seq2seq_forward.2} parent=39 // pred_fallthru
          _
        %p202 = scmp.lt.s32.totalorder %s17, 6
        %s203 = scalar_select %p202, %s17, 6
        %s204 = smul.addr %s203, 8
        %s205 = scalar_lea.vmem %s0, %s204
        %p206 = pneg %p38
        %p207 = pneg %p35
        %p208 = pneg %p59
        %p209 = pneg %p56
        %p210 = pneg %p80
        %p211 = pneg %p77
        %p212 = pneg %p101
        %p213 = pneg %p98
        %p214 = pneg %p122
        %p215 = pneg %p119
        %p216 = pneg %p143
        %p217 = pneg %p140
        %p218 = scmp.lt.s32.totalorder %s17, 6
        %s219 = scalar_select %p218, %s17, 6
        %s220 = smul.addr %s219, 8
        %s221 = scalar_lea.vmem %s0, %s220
        %p222 = scmp.eq.s32.totalorder %s17, 0
        // Predicated region
        $region45: #{seq2seq_forward.2} parent=39 // pred_check
          %p223 = pneg %p222
        $region46: #{seq2seq_forward.2} parent=39 // pred_check_branch
          %225 = sbr.rel (%p223) target = $region48
        $region47: #{seq2seq_forward.2} parent=39 // pred_region
          %226 = vst [vmem:[#allocation2] sm:$0xff] 0.0
        $region48: #{seq2seq_forward.2} parent=39 // pred_fallthru
          _
        %v227 = vld [vmem:[%s221] sm:$0xff]
        %v228 = vld [vmem:[#allocation2] sm:$0xff]
        %v229 = vld [vmem:[%s1] sm:$0xff]
        %v230 = vld [vmem:[%s1 + $0x8] sm:$0xff]
        %v231 = vld [vmem:[%s1 + $0x10] sm:$0xff]
        %v232 = vld [vmem:[%s1 + $0x18] sm:$0xff]
        %v233 = vld [vmem:[%s1 + $0x20] sm:$0xff]
        %v234 = vld [vmem:[%s1 + $0x28] sm:$0xff]
        %v235 = vld [vmem:[%s1 + $0x30] sm:$0xff]
        %v236 = vld [vmem:[%s1 + $0x38] sm:$0xff]
        %v237 = vld [vmem:[%s1 + $0x40] sm:$0xff]
        %v238 = vld [vmem:[%s1 + $0x48] sm:$0xff]
        %v239 = vld [vmem:[%s1 + $0x50] sm:$0xff]
        %v240 = vld [vmem:[%s1 + $0x58] sm:$0xff]
        %v241 = vld [vmem:[%s1 + $0x60] sm:$0xff]
        %v242 = vld [vmem:[%s1 + $0x68] sm:$0xff]
        %v243 = vld [vmem:[%s1 + $0x70] sm:$0xff]
        %v244 = vld [vmem:[%s1 + $0x78] sm:$0xff]
        %v245 = vld [vmem:[%s1 + $0x80] sm:$0xff]
        %v246 = vld [vmem:[%s1 + $0x88] sm:$0xff]
        %v247 = vld [vmem:[%s1 + $0x90] sm:$0xff]
        %v248 = vld [vmem:[%s1 + $0x98] sm:$0xff]
        %v249 = vld [vmem:[%s1 + $0xa0] sm:$0xff]
        %v250 = vld [vmem:[%s1 + $0xa8] sm:$0xff]
        %v251 = vld [vmem:[%s1 + $0xb0] sm:$0xff]
        %v252 = vld [vmem:[%s1 + $0xb8] sm:$0xff]
        %v253 = vld [vmem:[%s1 + $0xc0] sm:$0xff]
        %v254 = vld [vmem:[%s1 + $0xc8] sm:$0xff]
        %v255 = vld [vmem:[%s1 + $0xd0] sm:$0xff]
        %v256 = vld [vmem:[%s1 + $0xd8] sm:$0xff]
        %v257 = vld [vmem:[%s1 + $0xe0] sm:$0xff]
        %v258 = vld [vmem:[%s1 + $0xe8] sm:$0xff]
        %v259 = vld [vmem:[%s1 + $0xf0] sm:$0xff]
        %v260 = vld [vmem:[%s1 + $0xf8] sm:$0xff]
        %v261 = vld [vmem:[%s1 + $0x100] sm:$0xff]
        %v262 = vld [vmem:[%s1 + $0x108] sm:$0xff]
        %v263 = vld [vmem:[%s1 + $0x110] sm:$0xff]
        %v264 = vld [vmem:[%s1 + $0x118] sm:$0xff]
        %v265 = vld [vmem:[%s1 + $0x120] sm:$0xff]
        %v266 = vld [vmem:[%s1 + $0x128] sm:$0xff]
        %v267 = vld [vmem:[%s1 + $0x130] sm:$0xff]
        %v268 = vld [vmem:[%s1 + $0x138] sm:$0xff]
        %v269 = vld [vmem:[%s1 + $0x140] sm:$0xff]
        %v270 = vld [vmem:[%s1 + $0x148] sm:$0xff]
        %v271 = vld [vmem:[%s1 + $0x150] sm:$0xff]
        %v272 = vld [vmem:[%s1 + $0x158] sm:$0xff]
        %v273 = vld [vmem:[%s1 + $0x160] sm:$0xff]
        %v274 = vld [vmem:[%s1 + $0x168] sm:$0xff]
        %v275 = vld [vmem:[%s1 + $0x170] sm:$0xff]
        %v276 = vld [vmem:[%s1 + $0x178] sm:$0xff]
        %v277 = vld [vmem:[%s3] sm:$0x7]
        %v279 = vlaneseq
        %v280 = vshrl.u32 %v279, 7
        %v281 = vsub.s32 0, %v280
        %v282 = vrot.slane %v277, %v281
        %v283 = vlaneseq
        %v284 = vshrl.u32 %v283, 7
        %v285 = vsub.s32 1, %v284
        %v286 = vrot.slane %v277, %v285
        %v287 = vlaneseq
        %v288 = vshrl.u32 %v287, 7
        %v289 = vsub.s32 2, %v288
        %v290 = vrot.slane %v277, %v289
        %294 = vmatprep.subr.mxu0 %v275
        %295 = vmatpush1.msra.mxu0 %v274
        %296 = vmatprep.subr.mxu0 %v272
        %297 = vmatpush1.msra.mxu0 %v271
        %298 = vmatprep.subr.mxu0 %v269
        %299 = vmatpush1.msra.mxu0 %v268
        %300 = vmatprep.subr.mxu0 %v266
        %301 = vmatpush1.msra.mxu0 %v265
        %302 = vmatprep.subr.mxu0 %v263
        %303 = vmatpush1.msra.mxu0 %v262
        %304 = vmatprep.subr.mxu0 %v260
        %305 = vmatpush1.msra.mxu0 %v259
        %306 = vmatprep.subr.mxu0 %v257
        %307 = vmatpush1.msra.mxu0 %v256
        %308 = vmatprep.subr.mxu0 %v254
        %309 = vmatpush1.msra.mxu0 %v253
        %310 = vmatprep.subr.mxu0 %v251
        %311 = vmatpush1.msra.mxu0 %v250
        %312 = vmatprep.subr.mxu0 %v248
        %313 = vmatpush1.msra.mxu0 %v247
        %314 = vmatprep.subr.mxu0 %v245
        %315 = vmatpush1.msra.mxu0 %v244
        %316 = vmatprep.subr.mxu0 %v242
        %317 = vmatpush1.msra.mxu0 %v241
        %318 = vmatprep.subr.mxu0 %v239
        %319 = vmatpush1.msra.mxu0 %v238
        %320 = vmatprep.subr.mxu0 %v236
        %321 = vmatpush1.msra.mxu0 %v235
        %322 = vmatprep.subr.mxu0 %v233
        %323 = vmatpush1.msra.mxu0 %v232
        %324 = vmatprep.subr.mxu0 %v230
        %325 = vmatpush1.msra.mxu0 %v229
        %326 = vmatprep.subr.mxu0 0.0
        %327 = vmatpush2.msra.mxu0 0.0
        %328 = vmatprep.subr.mxu0 0.0
        %329 = vmatpush2.msra.mxu0 0.0
        %330 = vmatprep.subr.mxu0 0.0
        %331 = vmatpush2.msra.mxu0 0.0
        %332 = vmatprep.subr.mxu0 0.0
        %333 = vmatpush2.msra.mxu0 0.0
        %334 = vmatprep.subr.mxu0 0.0
        %335 = vmatpush2.msra.mxu0 0.0
        %336 = vmatprep.subr.mxu0 0.0
        %337 = vmatpush2.msra.mxu0 0.0
        %338 = vmatprep.subr.mxu0 0.0
        %339 = vmatpush2.msra.mxu0 0.0
        %340 = vmatprep.subr.mxu0 0.0
        %341 = vmatpush2.msra.mxu0 0.0
        %342 = vmatprep.subr.mxu0 0.0
        %343 = vmatpush2.msra.mxu0 0.0
        %344 = vmatprep.subr.mxu0 0.0
        %345 = vmatpush2.msra.mxu0 0.0
        %346 = vmatprep.subr.mxu0 0.0
        %347 = vmatpush2.msra.mxu0 0.0
        %348 = vmatprep.subr.mxu0 0.0
        %349 = vmatpush2.msra.mxu0 0.0
        %350 = vmatprep.subr.mxu0 0.0
        %351 = vmatpush2.msra.mxu0 0.0
        %352 = vmatprep.subr.mxu0 0.0
        %353 = vmatpush2.msra.mxu0 0.0
        %354 = vmatprep.subr.mxu0 0.0
        %355 = vmatpush2.msra.mxu0 0.0
        %356 = vmatprep.subr.mxu0 0.0
        %357 = vmatpush2.msra.mxu0 0.0
        %358 = vmatprep.mubr.f32.mxu0 0.0
        %359 = vmatmul.mubr.f32.gmra.mxu0 %v227
        %v360 = vpop.f32.mrf.mxu0
        %v361 = vadd.f32 %v282, %v360
        %v362 = vpop.f32.mrf.mxu0
        %v363 = vadd.f32 %v286, %v362
        %364 = vdwg.mxu0
        %365 = vmatprep.subr.mxu0 0.0
        %366 = vmatpush1.msra.mxu0 %v276
        %367 = vmatprep.subr.mxu0 0.0
        %368 = vmatpush1.msra.mxu0 %v273
        %369 = vmatprep.subr.mxu0 0.0
        %370 = vmatpush1.msra.mxu0 %v270
        %371 = vmatprep.subr.mxu0 0.0
        %372 = vmatpush1.msra.mxu0 %v267
        %373 = vmatprep.subr.mxu0 0.0
        %374 = vmatpush1.msra.mxu0 %v264
        %375 = vmatprep.subr.mxu0 0.0
        %376 = vmatpush1.msra.mxu0 %v261
        %377 = vmatprep.subr.mxu0 0.0
        %378 = vmatpush1.msra.mxu0 %v258
        %379 = vmatprep.subr.mxu0 0.0
        %380 = vmatpush1.msra.mxu0 %v255
        %381 = vmatprep.subr.mxu0 0.0
        %382 = vmatpush1.msra.mxu0 %v252
        %383 = vmatprep.subr.mxu0 0.0
        %384 = vmatpush1.msra.mxu0 %v249
        %385 = vmatprep.subr.mxu0 0.0
        %386 = vmatpush1.msra.mxu0 %v246
        %387 = vmatprep.subr.mxu0 0.0
        %388 = vmatpush1.msra.mxu0 %v243
        %389 = vmatprep.subr.mxu0 0.0
        %390 = vmatpush1.msra.mxu0 %v240
        %391 = vmatprep.subr.mxu0 0.0
        %392 = vmatpush1.msra.mxu0 %v237
        %393 = vmatprep.subr.mxu0 0.0
        %394 = vmatpush1.msra.mxu0 %v234
        %395 = vmatprep.subr.mxu0 0.0
        %396 = vmatpush1.msra.mxu0 %v231
        %397 = vmatprep.subr.mxu0 0.0
        %398 = vmatpush2.msra.mxu0 0.0
        %399 = vmatprep.subr.mxu0 0.0
        %400 = vmatpush2.msra.mxu0 0.0
        %401 = vmatprep.subr.mxu0 0.0
        %402 = vmatpush2.msra.mxu0 0.0
        %403 = vmatprep.subr.mxu0 0.0
        %404 = vmatpush2.msra.mxu0 0.0
        %405 = vmatprep.subr.mxu0 0.0
        %406 = vmatpush2.msra.mxu0 0.0
        %407 = vmatprep.subr.mxu0 0.0
        %408 = vmatpush2.msra.mxu0 0.0
        %409 = vmatprep.subr.mxu0 0.0
        %410 = vmatpush2.msra.mxu0 0.0
        %411 = vmatprep.subr.mxu0 0.0
        %412 = vmatpush2.msra.mxu0 0.0
        %413 = vmatprep.subr.mxu0 0.0
        %414 = vmatpush2.msra.mxu0 0.0
        %415 = vmatprep.subr.mxu0 0.0
        %416 = vmatpush2.msra.mxu0 0.0
        %417 = vmatprep.subr.mxu0 0.0
        %418 = vmatpush2.msra.mxu0 0.0
        %419 = vmatprep.subr.mxu0 0.0
        %420 = vmatpush2.msra.mxu0 0.0
        %421 = vmatprep.subr.mxu0 0.0
        %422 = vmatpush2.msra.mxu0 0.0
        %423 = vmatprep.subr.mxu0 0.0
        %424 = vmatpush2.msra.mxu0 0.0
        %425 = vmatprep.subr.mxu0 0.0
        %426 = vmatpush2.msra.mxu0 0.0
        %427 = vmatprep.subr.mxu0 0.0
        %428 = vmatpush2.msra.mxu0 0.0
        %429 = vmatprep.mubr.f32.mxu0 0.0
        %430 = vmatmul.mubr.f32.gmra.mxu0 %v227
        %v431 = vpop.f32.mrf.mxu0
        %v432 = vadd.f32 %v290, %v431
        %v433 = vpop.f32.mrf.mxu0
        %434 = vdwg.mxu0
        %v435 = vld [vmem:[#allocation3] sm:$0xff]
        %v436 = vld [vmem:[#allocation3 + $0x8] sm:$0xff]
        %v437 = vld [vmem:[#allocation3 + $0x10] sm:$0xff]
        %v438 = vld [vmem:[#allocation3 + $0x18] sm:$0xff]
        %v439 = vld [vmem:[#allocation3 + $0x20] sm:$0xff]
        %v440 = vld [vmem:[#allocation3 + $0x28] sm:$0xff]
        %v441 = vld [vmem:[#allocation3 + $0x30] sm:$0xff]
        %v442 = vld [vmem:[#allocation3 + $0x38] sm:$0xff]
        %v443 = vld [vmem:[#allocation3 + $0x40] sm:$0xff]
        %v444 = vld [vmem:[#allocation3 + $0x48] sm:$0xff]
        %v445 = vld [vmem:[#allocation3 + $0x50] sm:$0xff]
        %v446 = vld [vmem:[#allocation3 + $0x58] sm:$0xff]
        %v447 = vld [vmem:[#allocation3 + $0x60] sm:$0xff]
        %v448 = vld [vmem:[#allocation3 + $0x68] sm:$0xff]
        %v449 = vld [vmem:[#allocation3 + $0x70] sm:$0xff]
        %v450 = vld [vmem:[#allocation3 + $0x78] sm:$0xff]
        %v451 = vld [vmem:[#allocation3 + $0x80] sm:$0xff]
        %v452 = vld [vmem:[#allocation3 + $0x88] sm:$0xff]
        %v453 = vld [vmem:[#allocation3 + $0x90] sm:$0xff]
        %v454 = vld [vmem:[#allocation3 + $0x98] sm:$0xff]
        %v455 = vld [vmem:[#allocation3 + $0xa0] sm:$0xff]
        %v456 = vld [vmem:[#allocation3 + $0xa8] sm:$0xff]
        %v457 = vld [vmem:[#allocation3 + $0xb0] sm:$0xff]
        %v458 = vld [vmem:[#allocation3 + $0xb8] sm:$0xff]
        %v459 = vld [vmem:[#allocation3 + $0xc0] sm:$0xff]
        %v460 = vld [vmem:[#allocation3 + $0xc8] sm:$0xff]
        %v461 = vld [vmem:[#allocation3 + $0xd0] sm:$0xff]
        %v462 = vld [vmem:[#allocation3 + $0xd8] sm:$0xff]
        %v463 = vld [vmem:[#allocation3 + $0xe0] sm:$0xff]
        %v464 = vld [vmem:[#allocation3 + $0xe8] sm:$0xff]
        %v465 = vld [vmem:[#allocation3 + $0xf0] sm:$0xff]
        %v466 = vld [vmem:[#allocation3 + $0xf8] sm:$0xff]
        %v467 = vld [vmem:[#allocation3 + $0x100] sm:$0xff]
        %v468 = vld [vmem:[#allocation3 + $0x108] sm:$0xff]
        %v469 = vld [vmem:[#allocation3 + $0x110] sm:$0xff]
        %v470 = vld [vmem:[#allocation3 + $0x118] sm:$0xff]
        %v471 = vld [vmem:[#allocation3 + $0x120] sm:$0xff]
        %v472 = vld [vmem:[#allocation3 + $0x128] sm:$0xff]
        %v473 = vld [vmem:[#allocation3 + $0x130] sm:$0xff]
        %v474 = vld [vmem:[#allocation3 + $0x138] sm:$0xff]
        %v475 = vld [vmem:[#allocation3 + $0x140] sm:$0xff]
        %v476 = vld [vmem:[#allocation3 + $0x148] sm:$0xff]
        %v477 = vld [vmem:[#allocation3 + $0x150] sm:$0xff]
        %v478 = vld [vmem:[#allocation3 + $0x158] sm:$0xff]
        %v479 = vld [vmem:[#allocation3 + $0x160] sm:$0xff]
        %v480 = vld [vmem:[#allocation3 + $0x168] sm:$0xff]
        %v481 = vld [vmem:[#allocation3 + $0x170] sm:$0xff]
        %v482 = vld [vmem:[#allocation3 + $0x178] sm:$0xff]
        %v483 = vld [vmem:[%s4] sm:$0x7]
        %v485 = vlaneseq
        %v486 = vshrl.u32 %v485, 7
        %v487 = vsub.s32 0, %v486
        %v488 = vrot.slane %v483, %v487
        %v489 = vlaneseq
        %v490 = vshrl.u32 %v489, 7
        %v491 = vsub.s32 1, %v490
        %v492 = vrot.slane %v483, %v491
        %v493 = vlaneseq
        %v494 = vshrl.u32 %v493, 7
        %v495 = vsub.s32 2, %v494
        %v496 = vrot.slane %v483, %v495
        %500 = vmatprep.subr.mxu0 %v481
        %501 = vmatpush1.msra.mxu0 %v480
        %502 = vmatprep.subr.mxu0 %v478
        %503 = vmatpush1.msra.mxu0 %v477
        %504 = vmatprep.subr.mxu0 %v475
        %505 = vmatpush1.msra.mxu0 %v474
        %506 = vmatprep.subr.mxu0 %v472
        %507 = vmatpush1.msra.mxu0 %v471
        %508 = vmatprep.subr.mxu0 %v469
        %509 = vmatpush1.msra.mxu0 %v468
        %510 = vmatprep.subr.mxu0 %v466
        %511 = vmatpush1.msra.mxu0 %v465
        %512 = vmatprep.subr.mxu0 %v463
        %513 = vmatpush1.msra.mxu0 %v462
        %514 = vmatprep.subr.mxu0 %v460
        %515 = vmatpush1.msra.mxu0 %v459
        %516 = vmatprep.subr.mxu0 %v457
        %517 = vmatpush1.msra.mxu0 %v456
        %518 = vmatprep.subr.mxu0 %v454
        %519 = vmatpush1.msra.mxu0 %v453
        %520 = vmatprep.subr.mxu0 %v451
        %521 = vmatpush1.msra.mxu0 %v450
        %522 = vmatprep.subr.mxu0 %v448
        %523 = vmatpush1.msra.mxu0 %v447
        %524 = vmatprep.subr.mxu0 %v445
        %525 = vmatpush1.msra.mxu0 %v444
        %526 = vmatprep.subr.mxu0 %v442
        %527 = vmatpush1.msra.mxu0 %v441
        %528 = vmatprep.subr.mxu0 %v439
        %529 = vmatpush1.msra.mxu0 %v438
        %530 = vmatprep.subr.mxu0 %v436
        %531 = vmatpush1.msra.mxu0 %v435
        %532 = vmatprep.subr.mxu0 0.0
        %533 = vmatpush2.msra.mxu0 0.0
        %534 = vmatprep.subr.mxu0 0.0
        %535 = vmatpush2.msra.mxu0 0.0
        %536 = vmatprep.subr.mxu0 0.0
        %537 = vmatpush2.msra.mxu0 0.0
        %538 = vmatprep.subr.mxu0 0.0
        %539 = vmatpush2.msra.mxu0 0.0
        %540 = vmatprep.subr.mxu0 0.0
        %541 = vmatpush2.msra.mxu0 0.0
        %542 = vmatprep.subr.mxu0 0.0
        %543 = vmatpush2.msra.mxu0 0.0
        %544 = vmatprep.subr.mxu0 0.0
        %545 = vmatpush2.msra.mxu0 0.0
        %546 = vmatprep.subr.mxu0 0.0
        %547 = vmatpush2.msra.mxu0 0.0
        %548 = vmatprep.subr.mxu0 0.0
        %549 = vmatpush2.msra.mxu0 0.0
        %550 = vmatprep.subr.mxu0 0.0
        %551 = vmatpush2.msra.mxu0 0.0
        %552 = vmatprep.subr.mxu0 0.0
        %553 = vmatpush2.msra.mxu0 0.0
        %554 = vmatprep.subr.mxu0 0.0
        %555 = vmatpush2.msra.mxu0 0.0
        %556 = vmatprep.subr.mxu0 0.0
        %557 = vmatpush2.msra.mxu0 0.0
        %558 = vmatprep.subr.mxu0 0.0
        %559 = vmatpush2.msra.mxu0 0.0
        %560 = vmatprep.subr.mxu0 0.0
        %561 = vmatpush2.msra.mxu0 0.0
        %562 = vmatprep.subr.mxu0 0.0
        %563 = vmatpush2.msra.mxu0 0.0
        %564 = vmatprep.mubr.f32.mxu0 0.0
        %565 = vmatmul.mubr.f32.gmra.mxu0 %v228
        %v566 = vpop.f32.mrf.mxu0
        %v567 = vadd.f32 %v488, %v566
        %v568 = vpop.f32.mrf.mxu0
        %v569 = vadd.f32 %v492, %v568
        %570 = vdwg.mxu0
        %571 = vmatprep.subr.mxu0 0.0
        %572 = vmatpush1.msra.mxu0 %v482
        %573 = vmatprep.subr.mxu0 0.0
        %574 = vmatpush1.msra.mxu0 %v479
        %575 = vmatprep.subr.mxu0 0.0
        %576 = vmatpush1.msra.mxu0 %v476
        %577 = vmatprep.subr.mxu0 0.0
        %578 = vmatpush1.msra.mxu0 %v473
        %579 = vmatprep.subr.mxu0 0.0
        %580 = vmatpush1.msra.mxu0 %v470
        %581 = vmatprep.subr.mxu0 0.0
        %582 = vmatpush1.msra.mxu0 %v467
        %583 = vmatprep.subr.mxu0 0.0
        %584 = vmatpush1.msra.mxu0 %v464
        %585 = vmatprep.subr.mxu0 0.0
        %586 = vmatpush1.msra.mxu0 %v461
        %587 = vmatprep.subr.mxu0 0.0
        %588 = vmatpush1.msra.mxu0 %v458
        %589 = vmatprep.subr.mxu0 0.0
        %590 = vmatpush1.msra.mxu0 %v455
        %591 = vmatprep.subr.mxu0 0.0
        %592 = vmatpush1.msra.mxu0 %v452
        %593 = vmatprep.subr.mxu0 0.0
        %594 = vmatpush1.msra.mxu0 %v449
        %595 = vmatprep.subr.mxu0 0.0
        %596 = vmatpush1.msra.mxu0 %v446
        %597 = vmatprep.subr.mxu0 0.0
        %598 = vmatpush1.msra.mxu0 %v443
        %599 = vmatprep.subr.mxu0 0.0
        %600 = vmatpush1.msra.mxu0 %v440
        %601 = vmatprep.subr.mxu0 0.0
        %602 = vmatpush1.msra.mxu0 %v437
        %603 = vmatprep.subr.mxu0 0.0
        %604 = vmatpush2.msra.mxu0 0.0
        %605 = vmatprep.subr.mxu0 0.0
        %606 = vmatpush2.msra.mxu0 0.0
        %607 = vmatprep.subr.mxu0 0.0
        %608 = vmatpush2.msra.mxu0 0.0
        %609 = vmatprep.subr.mxu0 0.0
        %610 = vmatpush2.msra.mxu0 0.0
        %611 = vmatprep.subr.mxu0 0.0
        %612 = vmatpush2.msra.mxu0 0.0
        %613 = vmatprep.subr.mxu0 0.0
        %614 = vmatpush2.msra.mxu0 0.0
        %615 = vmatprep.subr.mxu0 0.0
        %616 = vmatpush2.msra.mxu0 0.0
        %617 = vmatprep.subr.mxu0 0.0
        %618 = vmatpush2.msra.mxu0 0.0
        %619 = vmatprep.subr.mxu0 0.0
        %620 = vmatpush2.msra.mxu0 0.0
        %621 = vmatprep.subr.mxu0 0.0
        %622 = vmatpush2.msra.mxu0 0.0
        %623 = vmatprep.subr.mxu0 0.0
        %624 = vmatpush2.msra.mxu0 0.0
        %625 = vmatprep.subr.mxu0 0.0
        %626 = vmatpush2.msra.mxu0 0.0
        %627 = vmatprep.subr.mxu0 0.0
        %628 = vmatpush2.msra.mxu0 0.0
        %629 = vmatprep.subr.mxu0 0.0
        %630 = vmatpush2.msra.mxu0 0.0
        %631 = vmatprep.subr.mxu0 0.0
        %632 = vmatpush2.msra.mxu0 0.0
        %633 = vmatprep.subr.mxu0 0.0
        %634 = vmatpush2.msra.mxu0 0.0
        %635 = vmatprep.mubr.f32.mxu0 0.0
        %636 = vmatmul.mubr.f32.gmra.mxu0 %v228
        %v637 = vpop.f32.mrf.mxu0
        %v638 = vadd.f32 %v496, %v637
        %v639 = vpop.f32.mrf.mxu0
        %640 = vdwg.mxu0
        %v641 = vadd.f32 %v361, %v567
        %v642 = vxor.u32 %v641, 2147483648
        %v643 = vmul.f32 %v642, 1.442695
        %v644 = vpow.pop %v643
        %v645 = vadd.f32 %v644, 1.0
        %v646 = vrcp.pop %v645
        %v647 = vmul.f32 1.0, %v646
        %v648 = vadd.f32 %v363, %v569
        %v649 = vxor.u32 %v648, 2147483648
        %v650 = vmul.f32 %v649, 1.442695
        %v651 = vpow.pop %v650
        %v652 = vadd.f32 %v651, 1.0
        %v653 = vrcp.pop %v652
        %v654 = vmul.f32 1.0, %v653
        %v655 = vmul.f32 %v647, %v638
        %v656 = vadd.f32 %v432, %v655
        %v657 = vtanh.pop %v656
        %v658 = vsub.f32 1.0, %v654
        %v659 = vmul.f32 %v658, %v657
        %v660 = vmul.f32 %v654, %v228
        %v661 = vadd.f32 %v659, %v660
        %662 = vst [vmem:[#allocation2] sm:$0xff] %v661
        %663 = vst [vmem:[%s5] sm:$0xff] %v661
        // Predicated region
        $region49: #{seq2seq_forward.2} parent=39 // pred_check
          %p664 = pneg %p140
        $region50: #{seq2seq_forward.2} parent=39 // pred_check_branch
          %666 = sbr.rel (%p664) target = $region52
        $region51: #{seq2seq_forward.2} parent=39 // pred_region
          _
        $region52: #{seq2seq_forward.2} parent=39 // pred_fallthru
          _
        // Predicated region
        $region53: #{seq2seq_forward.2} parent=39 // pred_check
          %p667 = pneg %p140
        $region54: #{seq2seq_forward.2} parent=39 // pred_check_branch
          %669 = sbr.rel (%p667) target = $region56
        $region55: #{seq2seq_forward.2} parent=39 // pred_region
          _
        $region56: #{seq2seq_forward.2} parent=39 // pred_fallthru
          _
      $region40: #{seq2seq_forward.2} parent=5 // pred_fallthru
        _
      %p670 = scmp.le.s32.totalorder 2, %s12
      // Predicated region
      $region57: #{seq2seq_forward.2} parent=5 // pred_check
        %p671 = pneg %p670
      $region58: #{seq2seq_forward.2} parent=5 // pred_check_branch
        %673 = sbr.rel (%p671) target = $region60
      $region59: #{seq2seq_forward.2} parent=5 // pred_region
        %s674 = ssub.s32 %s12, 2
      $region60: #{seq2seq_forward.2} parent=5 // pred_fallthru
        _
    $region6: #{seq2seq_forward.2} parent=1 // loop_footer
      %s16 = sadd.s32 1, %s12
    $region7: #{seq2seq_forward.2} parent=1 // loop_footer_branch
      %11 = sbr.rel target = $region3
    $region8: #{seq2seq_forward.2} parent=1 // loop_exit
      _
    %675 = vsyncpa [#allocation4], 1
    %s676 = scalar_lea.sflag [#allocation4], 1
    %677 = vsyncpa %s676, 1

// kernel: seq2seq_forward.3
$region0: #{seq2seq_forward.3}
  #allocation0 [shape = 'u32[]', space=smem, size = 0x4, offset = 0x4, fixed_abs, tag = 'smem constant byte address 0x4 - core index']
  #allocation1 [shape = 'u32[144,128]{1,0:T(1,128)}', space=vmem, size = 0x12000, scoped, tag = 'internal scratch']
  #allocation2 [shape = 'f32[8,128]{1,0:T(8,128)}', space=vmem, size = 0x1000, scoped, tag = 'scratch operand']
  #allocation3 [shape = 'f32[8,128]{1,0:T(8,128)}', space=vmem, size = 0x1000, scoped, tag = 'scratch operand']
  #allocation4 [shape = 'f32[8,384]{1,0:T(8,128)}', space=vmem, size = 0x3000, scoped, tag = 'scratch operand']
  #allocation5 [shape = 'f32[8,128]{1,0:T(8,128)}', space=vmem, size = 0x1000, scoped, tag = 'scratch operand']
  #allocation6 [shape = 's32[1]{0}', space=sflag, size = 0x4, scoped, tag = 'scoped memory for seq2seq_forward.3']
  #allocation7 [shape = 'u8[512]{0}', space=smem, size = 0x200, scoped, tag = 'prefetched SMEM operand 0']
  %s0 = inlined_call_operand.vmem [shape: s32[4], index: 0, kind: input, shape index: {}]
  %s1 = inlined_call_operand.vmem [shape: f32[4,8,128], index: 1, kind: input, shape index: {}]
  %s2 = inlined_call_operand.vmem [shape: f32[8,128], index: 2, kind: input, shape index: {}]
  %s3 = inlined_call_operand.hbm [shape: f32[128,128], index: 3, kind: input, shape index: {}]
  %s4 = inlined_call_operand.vmem [shape: f32[128,384], index: 4, kind: input, shape index: {}]
  %s5 = inlined_call_operand.vmem [shape: f32[128,384], index: 5, kind: input, shape index: {}]
  %s6 = inlined_call_operand.vmem [shape: f32[128,384], index: 6, kind: input, shape index: {}]
  %s7 = inlined_call_operand.vmem [shape: f32[1,384], index: 7, kind: input, shape index: {}]
  %s8 = inlined_call_operand.vmem [shape: f32[1,384], index: 8, kind: input, shape index: {}]
  %s9 = inlined_call_operand.hbm [shape: f32[128,128], index: 9, kind: input, shape index: {}]
  %s10 = inlined_call_operand.hbm [shape: f32[128,128], index: 10, kind: input, shape index: {}]
  %s11 = inlined_call_operand.hbm [shape: f32[128,128], index: 11, kind: input, shape index: {}]
  %s12 = inlined_call_operand.vmem [shape: f32[1,128], index: 12, kind: input, shape index: {}]
  %s13 = inlined_call_operand.vmem [shape: f32[4,8,128], index: 13, kind: output, shape index: {}]
  %s14 = sld [smem:[#allocation0]]
  $region101: #{seq2seq_forward.3} parent=0
    _
  %s16 = ssub.s32 1, %s14
  %s17 = scalar_select 0, %s16, %s14
  %s18 = sshll.u32 %s0, 4
  %s19 = int_to_ptr.vmem [resolvable:$true] %s18
  %21 = dma.vmem_to_smem %s19, 16, [#allocation7], [#allocation6]
  %22 = dma.done [#allocation6], 16
  %23 = sfence
  $region1: #{seq2seq_forward.3} parent=0
    #allocation8 [shape = 'u8[65536]{0}', space=vmem, size = 0x10000, scoped, tag = 'input window, operand 3, single buffered']
    #allocation9 [shape = 's32[2]{0}', space=sflag, size = 0x8, scoped, tag = 'scoped memory for seq2seq_forward.3']
    #allocation10 [shape = 'u8[65536]{0}', space=vmem, size = 0x10000, scoped, tag = 'input window, operand 9, single buffered']
    #allocation11 [shape = 's32[1]{0}', space=sflag, size = 0x4, scoped, tag = 'scoped memory for seq2seq_forward.3']
    #allocation12 [shape = 'u8[65536]{0}', space=vmem, size = 0x10000, scoped, tag = 'input window, operand 10, single buffered']
    #allocation13 [shape = 'u8[65536]{0}', space=vmem, size = 0x10000, scoped, tag = 'input window, operand 11, single buffered']
    #allocation14 [shape = 's32[1]{0}', space=sflag, size = 0x4, scoped, tag = 'scoped memory for seq2seq_forward.3']
    %24 = vsyncpa [#allocation9], 0
    %25 = vsyncpa [#allocation11], 0
    %26 = vsyncpa [#allocation14], 0
    loop: start=0, step=1, limit=6
    $region2: #{seq2seq_forward.3} parent=1 // loop_pre_header
      _
    $region3: #{seq2seq_forward.3} parent=1 // loop_header
      %s28 = sphi 0, %s32
      %p29 = scmp.ge.s32.totalorder %s28, 6
      %s38 = sphi 0, %s40
      %s41 = sphi 0, %s38
      %s42 = sphi 0, %s41
      %s58 = sphi 0, %s42
      %s62 = sphi 0, %s62
      %s64 = sphi 0, %s62
      %s65 = sphi 0, %s64
      %s79 = sphi 0, %s65
      %s83 = sphi 0, %s83
      %s85 = sphi 0, %s83
      %s86 = sphi 0, %s85
      %s100 = sphi 0, %s86
      %s104 = sphi 0, %s104
      %s106 = sphi 0, %s104
      %s107 = sphi 0, %s106
      %s121 = sphi 0, %s107
      %s125 = sphi 0, %s125
      %s127 = sphi 0, %s125
      %s128 = sphi 0, %s127
      %s142 = sphi 0, %s128
      %s146 = sphi 0, %s146
      %s148 = sphi 0, %s146
      %s149 = sphi 0, %s148
      %s163 = sphi 0, %s149
      %s167 = sphi 0, %s167
      %s169 = sphi 0, %s167
      %s170 = sphi 0, %s169
      %s184 = sphi 0, %s170
      %s188 = sphi 0, %s188
      %s190 = sphi 0, %s188
      %s191 = sphi 0, %s190
      %s205 = sphi 0, %s191
      %s209 = sphi 0, %s209
      %s211 = sphi 0, %s209
      %s212 = sphi 0, %s211
      %s226 = sphi 0, %s212
      %s230 = sphi 0, %s230
      %s232 = sphi 0, %s230
      %s233 = sphi 0, %s232
      %s247 = sphi 0, %s233
      %s251 = sphi 0, %s251
      %s253 = sphi 0, %s251
      %s254 = sphi 0, %s253
      %s268 = sphi 0, %s254
      %s272 = sphi 0, %s272
      %s274 = sphi 0, %s272
      %s275 = sphi 0, %s274
      %s289 = sphi 0, %s275
      %s295 = sphi 0, %s297
      %s298 = sphi 0, %s295
      %s299 = sphi 0, %s298
      %s315 = sphi 0, %s299
    $region4: #{seq2seq_forward.3} parent=1 // loop_header_branch
      %31 = sbr.rel (%p29) target = $region8
    $region5: #{seq2seq_forward.3} parent=1 // loop_body
      %s33 = ssub.s32 %s28, 1
      %s34 = ssub.s32 %s28, 2
      %s35 = sadd.s32 %s28, 1
      %s36 = ssub.s32 %s28, %s35
      %p37 = scmp.eq.s32.totalorder %s36, 0
      %s39 = sadd.s32 %s38, 1
      %s40 = scalar_select %p37, %s38, %s39
      %p43 = pneg %p37
      %p44 = scmp.eq.s32.totalorder %s28, 3
      %p45 = por %p43, %p44
      %p46 = scmp.ne.s32.totalorder %s38, %s41
      %p47 = scmp.eq.s32.totalorder %s28, 0
      %p48 = por %p46, %p47
      %p49 = scmp.ne.s32.totalorder %s38, %s41
      %p50 = scmp.eq.s32.totalorder %s33, 3
      %p51 = por %p49, %p50
      %p52 = scmp.ne.s32.totalorder %s41, %s42
      %p53 = scmp.eq.s32.totalorder %s33, 0
      %p54 = por %p52, %p53
      %p55 = scmp.ne.s32.totalorder %s41, %s42
      %p56 = scmp.eq.s32.totalorder %s34, 3
      %p57 = por %p55, %p56
      %p59 = scmp.ne.s32.totalorder %s42, %s58
      %p60 = scmp.eq.s32.totalorder %s34, 0
      %p61 = por %p59, %p60
      %s63 = sadd.s32 %s62, 1
      %p66 = scmp.eq.s32.totalorder %s28, 3
      %p67 = scmp.ne.s32.totalorder %s62, %s64
      %p68 = scmp.eq.s32.totalorder %s28, 0
      %p69 = por %p67, %p68
      %p70 = scmp.ne.s32.totalorder %s62, %s64
      %p71 = scmp.eq.s32.totalorder %s33, 3
      %p72 = por %p70, %p71
      %p73 = scmp.ne.s32.totalorder %s64, %s65
      %p74 = scmp.eq.s32.totalorder %s33, 0
      %p75 = por %p73, %p74
      %p76 = scmp.ne.s32.totalorder %s64, %s65
      %p77 = scmp.eq.s32.totalorder %s34, 3
      %p78 = por %p76, %p77
      %p80 = scmp.ne.s32.totalorder %s65, %s79
      %p81 = scmp.eq.s32.totalorder %s34, 0
      %p82 = por %p80, %p81
      %s84 = sadd.s32 %s83, 1
      %p87 = scmp.eq.s32.totalorder %s28, 3
      %p88 = scmp.ne.s32.totalorder %s83, %s85
      %p89 = scmp.eq.s32.totalorder %s28, 0
      %p90 = por %p88, %p89
      %p91 = scmp.ne.s32.totalorder %s83, %s85
      %p92 = scmp.eq.s32.totalorder %s33, 3
      %p93 = por %p91, %p92
      %p94 = scmp.ne.s32.totalorder %s85, %s86
      %p95 = scmp.eq.s32.totalorder %s33, 0
      %p96 = por %p94, %p95
      %p97 = scmp.ne.s32.totalorder %s85, %s86
      %p98 = scmp.eq.s32.totalorder %s34, 3
      %p99 = por %p97, %p98
      %p101 = scmp.ne.s32.totalorder %s86, %s100
      %p102 = scmp.eq.s32.totalorder %s34, 0
      %p103 = por %p101, %p102
      %s105 = sadd.s32 %s104, 1
      %p108 = scmp.eq.s32.totalorder %s28, 3
      %p109 = scmp.ne.s32.totalorder %s104, %s106
      %p110 = scmp.eq.s32.totalorder %s28, 0
      %p111 = por %p109, %p110
      %p112 = scmp.ne.s32.totalorder %s104, %s106
      %p113 = scmp.eq.s32.totalorder %s33, 3
      %p114 = por %p112, %p113
      %p115 = scmp.ne.s32.totalorder %s106, %s107
      %p116 = scmp.eq.s32.totalorder %s33, 0
      %p117 = por %p115, %p116
      %p118 = scmp.ne.s32.totalorder %s106, %s107
      %p119 = scmp.eq.s32.totalorder %s34, 3
      %p120 = por %p118, %p119
      %p122 = scmp.ne.s32.totalorder %s107, %s121
      %p123 = scmp.eq.s32.totalorder %s34, 0
      %p124 = por %p122, %p123
      %s126 = sadd.s32 %s125, 1
      %p129 = scmp.eq.s32.totalorder %s28, 3
      %p130 = scmp.ne.s32.totalorder %s125, %s127
      %p131 = scmp.eq.s32.totalorder %s28, 0
      %p132 = por %p130, %p131
      %p133 = scmp.ne.s32.totalorder %s125, %s127
      %p134 = scmp.eq.s32.totalorder %s33, 3
      %p135 = por %p133, %p134
      %p136 = scmp.ne.s32.totalorder %s127, %s128
      %p137 = scmp.eq.s32.totalorder %s33, 0
      %p138 = por %p136, %p137
      %p139 = scmp.ne.s32.totalorder %s127, %s128
      %p140 = scmp.eq.s32.totalorder %s34, 3
      %p141 = por %p139, %p140
      %p143 = scmp.ne.s32.totalorder %s128, %s142
      %p144 = scmp.eq.s32.totalorder %s34, 0
      %p145 = por %p143, %p144
      %s147 = sadd.s32 %s146, 1
      %p150 = scmp.eq.s32.totalorder %s28, 3
      %p151 = scmp.ne.s32.totalorder %s146, %s148
      %p152 = scmp.eq.s32.totalorder %s28, 0
      %p153 = por %p151, %p152
      %p154 = scmp.ne.s32.totalorder %s146, %s148
      %p155 = scmp.eq.s32.totalorder %s33, 3
      %p156 = por %p154, %p155
      %p157 = scmp.ne.s32.totalorder %s148, %s149
      %p158 = scmp.eq.s32.totalorder %s33, 0
      %p159 = por %p157, %p158
      %p160 = scmp.ne.s32.totalorder %s148, %s149
      %p161 = scmp.eq.s32.totalorder %s34, 3
      %p162 = por %p160, %p161
      %p164 = scmp.ne.s32.totalorder %s149, %s163
      %p165 = scmp.eq.s32.totalorder %s34, 0
      %p166 = por %p164, %p165
      %s168 = sadd.s32 %s167, 1
      %p171 = scmp.eq.s32.totalorder %s28, 3
      %p172 = scmp.ne.s32.totalorder %s167, %s169
      %p173 = scmp.eq.s32.totalorder %s28, 0
      %p174 = por %p172, %p173
      %p175 = scmp.ne.s32.totalorder %s167, %s169
      %p176 = scmp.eq.s32.totalorder %s33, 3
      %p177 = por %p175, %p176
      %p178 = scmp.ne.s32.totalorder %s169, %s170
      %p179 = scmp.eq.s32.totalorder %s33, 0
      %p180 = por %p178, %p179
      %p181 = scmp.ne.s32.totalorder %s169, %s170
      %p182 = scmp.eq.s32.totalorder %s34, 3
      %p183 = por %p181, %p182
      %p185 = scmp.ne.s32.totalorder %s170, %s184
      %p186 = scmp.eq.s32.totalorder %s34, 0
      %p187 = por %p185, %p186
      %s189 = sadd.s32 %s188, 1
      %p192 = scmp.eq.s32.totalorder %s28, 3
      %p193 = scmp.ne.s32.totalorder %s188, %s190
      %p194 = scmp.eq.s32.totalorder %s28, 0
      %p195 = por %p193, %p194
      %p196 = scmp.ne.s32.totalorder %s188, %s190
      %p197 = scmp.eq.s32.totalorder %s33, 3
      %p198 = por %p196, %p197
      %p199 = scmp.ne.s32.totalorder %s190, %s191
      %p200 = scmp.eq.s32.totalorder %s33, 0
      %p201 = por %p199, %p200
      %p202 = scmp.ne.s32.totalorder %s190, %s191
      %p203 = scmp.eq.s32.totalorder %s34, 3
      %p204 = por %p202, %p203
      %p206 = scmp.ne.s32.totalorder %s191, %s205
      %p207 = scmp.eq.s32.totalorder %s34, 0
      %p208 = por %p206, %p207
      %s210 = sadd.s32 %s209, 1
      %p213 = scmp.eq.s32.totalorder %s28, 3
      %p214 = scmp.ne.s32.totalorder %s209, %s211
      %p215 = scmp.eq.s32.totalorder %s28, 0
      %p216 = por %p214, %p215
      %p217 = scmp.ne.s32.totalorder %s209, %s211
      %p218 = scmp.eq.s32.totalorder %s33, 3
      %p219 = por %p217, %p218
      %p220 = scmp.ne.s32.totalorder %s211, %s212
      %p221 = scmp.eq.s32.totalorder %s33, 0
      %p222 = por %p220, %p221
      %p223 = scmp.ne.s32.totalorder %s211, %s212
      %p224 = scmp.eq.s32.totalorder %s34, 3
      %p225 = por %p223, %p224
      %p227 = scmp.ne.s32.totalorder %s212, %s226
      %p228 = scmp.eq.s32.totalorder %s34, 0
      %p229 = por %p227, %p228
      %s231 = sadd.s32 %s230, 1
      %p234 = scmp.eq.s32.totalorder %s28, 3
      %p235 = scmp.ne.s32.totalorder %s230, %s232
      %p236 = scmp.eq.s32.totalorder %s28, 0
      %p237 = por %p235, %p236
      %p238 = scmp.ne.s32.totalorder %s230, %s232
      %p239 = scmp.eq.s32.totalorder %s33, 3
      %p240 = por %p238, %p239
      %p241 = scmp.ne.s32.totalorder %s232, %s233
      %p242 = scmp.eq.s32.totalorder %s33, 0
      %p243 = por %p241, %p242
      %p244 = scmp.ne.s32.totalorder %s232, %s233
      %p245 = scmp.eq.s32.totalorder %s34, 3
      %p246 = por %p244, %p245
      %p248 = scmp.ne.s32.totalorder %s233, %s247
      %p249 = scmp.eq.s32.totalorder %s34, 0
      %p250 = por %p248, %p249
      %s252 = sadd.s32 %s251, 1
      %p255 = scmp.eq.s32.totalorder %s28, 3
      %p256 = scmp.ne.s32.totalorder %s251, %s253
      %p257 = scmp.eq.s32.totalorder %s28, 0
      %p258 = por %p256, %p257
      %p259 = scmp.ne.s32.totalorder %s251, %s253
      %p260 = scmp.eq.s32.totalorder %s33, 3
      %p261 = por %p259, %p260
      %p262 = scmp.ne.s32.totalorder %s253, %s254
      %p263 = scmp.eq.s32.totalorder %s33, 0
      %p264 = por %p262, %p263
      %p265 = scmp.ne.s32.totalorder %s253, %s254
      %p266 = scmp.eq.s32.totalorder %s34, 3
      %p267 = por %p265, %p266
      %p269 = scmp.ne.s32.totalorder %s254, %s268
      %p270 = scmp.eq.s32.totalorder %s34, 0
      %p271 = por %p269, %p270
      %s273 = sadd.s32 %s272, 1
      %p276 = scmp.eq.s32.totalorder %s28, 3
      %p277 = scmp.ne.s32.totalorder %s272, %s274
      %p278 = scmp.eq.s32.totalorder %s28, 0
      %p279 = por %p277, %p278
      %p280 = scmp.ne.s32.totalorder %s272, %s274
      %p281 = scmp.eq.s32.totalorder %s33, 3
      %p282 = por %p280, %p281
      %p283 = scmp.ne.s32.totalorder %s274, %s275
      %p284 = scmp.eq.s32.totalorder %s33, 0
      %p285 = por %p283, %p284
      %p286 = scmp.ne.s32.totalorder %s274, %s275
      %p287 = scmp.eq.s32.totalorder %s34, 3
      %p288 = por %p286, %p287
      %p290 = scmp.ne.s32.totalorder %s275, %s289
      %p291 = scmp.eq.s32.totalorder %s34, 0
      %p292 = por %p290, %p291
      %s293 = ssub.s32 %s28, %s35
      %p294 = scmp.eq.s32.totalorder %s293, 0
      %s296 = sadd.s32 %s295, 1
      %s297 = scalar_select %p294, %s295, %s296
      %p300 = pneg %p294
      %p301 = scmp.eq.s32.totalorder %s28, 3
      %p302 = por %p300, %p301
      %p303 = scmp.ne.s32.totalorder %s295, %s298
      %p304 = scmp.eq.s32.totalorder %s28, 0
      %p305 = por %p303, %p304
      %p306 = scmp.ne.s32.totalorder %s295, %s298
      %p307 = scmp.eq.s32.totalorder %s33, 3
      %p308 = por %p306, %p307
      %p309 = scmp.ne.s32.totalorder %s298, %s299
      %p310 = scmp.eq.s32.totalorder %s33, 0
      %p311 = por %p309, %p310
      %p312 = scmp.ne.s32.totalorder %s298, %s299
      %p313 = scmp.eq.s32.totalorder %s34, 3
      %p314 = por %p312, %p313
      %p316 = scmp.ne.s32.totalorder %s299, %s315
      %p317 = scmp.eq.s32.totalorder %s34, 0
      %p318 = por %p316, %p317
      %p319 = scmp.le.s32.totalorder 1, %s28
      %p320 = scmp.lt.s32.totalorder %s28, 5
      %p321 = pnand %p319, %p320
      %p322 = pneg %p321
      // Predicated region
      $region9: #{seq2seq_forward.3} parent=5 // pred_check
        _
      $region10: #{seq2seq_forward.3} parent=5 // pred_check_branch
        %324 = sbr.rel (%p321) target = $region12
      $region11: #{seq2seq_forward.3} parent=5 // pred_region
        %s325 = ssub.s32 %s28, 1
        // Predicated region
        $region13: #{seq2seq_forward.3} parent=11 // pred_check
          %p326 = pneg %p75
        $region14: #{seq2seq_forward.3} parent=11 // pred_check_branch
          %328 = sbr.rel (%p326) target = $region16
        $region15: #{seq2seq_forward.3} parent=11 // pred_region
          _
        $region16: #{seq2seq_forward.3} parent=11 // pred_fallthru
          _
        // Predicated region
        $region17: #{seq2seq_forward.3} parent=11 // pred_check
          %p329 = pneg %p96
        $region18: #{seq2seq_forward.3} parent=11 // pred_check_branch
          %331 = sbr.rel (%p329) target = $region20
        $region19: #{seq2seq_forward.3} parent=11 // pred_region
          %s333 = ssub.s32 2048, 2048
          %334 = vsyncadd [#allocation9], %s333
          %s335 = sshll.u32 [#allocation8], 4
          %s336 = int_to_ptr.vmem [resolvable:$true] %s335
          %341 = dma.hbm_to_vmem [thread:$0]  %s3, 2048, %s336, [#allocation9], 128, 128, 8
        $region20: #{seq2seq_forward.3} parent=11 // pred_fallthru
          _
        // Predicated region
        $region21: #{seq2seq_forward.3} parent=11 // pred_check
          %p342 = pneg %p117
        $region22: #{seq2seq_forward.3} parent=11 // pred_check_branch
          %344 = sbr.rel (%p342) target = $region24
        $region23: #{seq2seq_forward.3} parent=11 // pred_region
          _
        $region24: #{seq2seq_forward.3} parent=11 // pred_fallthru
          _
        // Predicated region
        $region25: #{seq2seq_forward.3} parent=11 // pred_check
          %p345 = pneg %p138
        $region26: #{seq2seq_forward.3} parent=11 // pred_check_branch
          %347 = sbr.rel (%p345) target = $region28
        $region27: #{seq2seq_forward.3} parent=11 // pred_region
          _
        $region28: #{seq2seq_forward.3} parent=11 // pred_fallthru
          _
        // Predicated region
        $region29: #{seq2seq_forward.3} parent=11 // pred_check
          %p348 = pneg %p159
        $region30: #{seq2seq_forward.3} parent=11 // pred_check_branch
          %350 = sbr.rel (%p348) target = $region32
        $region31: #{seq2seq_forward.3} parent=11 // pred_region
          _
        $region32: #{seq2seq_forward.3} parent=11 // pred_fallthru
          _
        // Predicated region
        $region33: #{seq2seq_forward.3} parent=11 // pred_check
          %p351 = pneg %p180
        $region34: #{seq2seq_forward.3} parent=11 // pred_check_branch
          %353 = sbr.rel (%p351) target = $region36
        $region35: #{seq2seq_forward.3} parent=11 // pred_region
          _
        $region36: #{seq2seq_forward.3} parent=11 // pred_fallthru
          _
        // Predicated region
        $region37: #{seq2seq_forward.3} parent=11 // pred_check
          %p354 = pneg %p201
        $region38: #{seq2seq_forward.3} parent=11 // pred_check_branch
          %356 = sbr.rel (%p354) target = $region40
        $region39: #{seq2seq_forward.3} parent=11 // pred_region
          _
        $region40: #{seq2seq_forward.3} parent=11 // pred_fallthru
          _
        // Predicated region
        $region41: #{seq2seq_forward.3} parent=11 // pred_check
          %p357 = pneg %p222
        $region42: #{seq2seq_forward.3} parent=11 // pred_check_branch
          %359 = sbr.rel (%p357) target = $region44
        $region43: #{seq2seq_forward.3} parent=11 // pred_region
          %s361 = ssub.s32 2048, 2048
          %362 = vsyncadd [#allocation11], %s361
          %s363 = sshll.u32 [#allocation10], 4
          %s364 = int_to_ptr.vmem [resolvable:$true] %s363
          %369 = dma.hbm_to_vmem [thread:$0]  %s9, 2048, %s364, [#allocation11], 128, 128, 8
        $region44: #{seq2seq_forward.3} parent=11 // pred_fallthru
          _
        // Predicated region
        $region45: #{seq2seq_forward.3} parent=11 // pred_check
          %p370 = pneg %p243
        $region46: #{seq2seq_forward.3} parent=11 // pred_check_branch
          %372 = sbr.rel (%p370) target = $region48
        $region47: #{seq2seq_forward.3} parent=11 // pred_region
          %s374 = ssub.s32 2048, 2048
          %375 = vsyncadd [#allocation11], %s374
          %s376 = sshll.u32 [#allocation12], 4
          %s377 = int_to_ptr.vmem [resolvable:$true] %s376
          %382 = dma.hbm_to_vmem [thread:$0]  %s10, 2048, %s377, [#allocation11], 128, 128, 8
        $region48: #{seq2seq_forward.3} parent=11 // pred_fallthru
          _
        // Predicated region
        $region49: #{seq2seq_forward.3} parent=11 // pred_check
          %p383 = pneg %p264
        $region50: #{seq2seq_forward.3} parent=11 // pred_check_branch
          %385 = sbr.rel (%p383) target = $region52
        $region51: #{seq2seq_forward.3} parent=11 // pred_region
          %s387 = ssub.s32 2048, 2048
          %388 = vsyncadd [#allocation14], %s387
          %s389 = sshll.u32 [#allocation13], 4
          %s390 = int_to_ptr.vmem [resolvable:$true] %s389
          %395 = dma.hbm_to_vmem [thread:$0]  %s11, 2048, %s390, [#allocation14], 128, 128, 8
        $region52: #{seq2seq_forward.3} parent=11 // pred_fallthru
          _
        // Predicated region
        $region53: #{seq2seq_forward.3} parent=11 // pred_check
          %p396 = pneg %p285
        $region54: #{seq2seq_forward.3} parent=11 // pred_check_branch
          %398 = sbr.rel (%p396) target = $region56
        $region55: #{seq2seq_forward.3} parent=11 // pred_region
          _
        $region56: #{seq2seq_forward.3} parent=11 // pred_fallthru
          _
      $region12: #{seq2seq_forward.3} parent=5 // pred_fallthru
        _
      %p399 = scmp.lt.s32.totalorder %s28, 4
      // Predicated region
      $region57: #{seq2seq_forward.3} parent=5 // pred_check
        %p400 = pneg %p399
      $region58: #{seq2seq_forward.3} parent=5 // pred_check_branch
        %402 = sbr.rel (%p400) target = $region60
      $region59: #{seq2seq_forward.3} parent=5 // pred_region
        // Predicated region
        $region61: #{seq2seq_forward.3} parent=59 // pred_check
          %p403 = pneg %p48
        $region62: #{seq2seq_forward.3} parent=59 // pred_check_branch
          %405 = sbr.rel (%p403) target = $region64
        $region63: #{seq2seq_forward.3} parent=59 // pred_region
          %p406 = scmp.lt.s32.totalorder %s28, 3
          %s407 = scalar_select %p406, %s28, 3
          %s408 = smul.addr %s407, 8
          %s409 = scalar_lea.vmem %s1, %s408
        $region64: #{seq2seq_forward.3} parent=59 // pred_fallthru
          _
      $region60: #{seq2seq_forward.3} parent=5 // pred_fallthru
        _
      %p410 = scmp.le.s32.totalorder 1, %s28
      %p411 = scmp.lt.s32.totalorder %s28, 5
      %p412 = pnand %p410, %p411
      %p413 = pneg %p412
      // Predicated region
      $region65: #{seq2seq_forward.3} parent=5 // pred_check
        _
      $region66: #{seq2seq_forward.3} parent=5 // pred_check_branch
        %415 = sbr.rel (%p412) target = $region68
      $region67: #{seq2seq_forward.3} parent=5 // pred_region
        %s416 = ssub.s32 %s28, 1
        // Predicated region
        $region69: #{seq2seq_forward.3} parent=67 // pred_check
          %p417 = pneg %p96
        $region70: #{seq2seq_forward.3} parent=67 // pred_check_branch
          %419 = sbr.rel (%p417) target = $region72
        $region71: #{seq2seq_forward.3} parent=67 // pred_region
          %420 = dma.done [#allocation9], 2048
        $region72: #{seq2seq_forward.3} parent=67 // pred_fallthru
          _
        // Predicated region
        $region73: #{seq2seq_forward.3} parent=67 // pred_check
          %p421 = pneg %p222
        $region74: #{seq2seq_forward.3} parent=67 // pred_check_branch
          %423 = sbr.rel (%p421) target = $region76
        $region75: #{seq2seq_forward.3} parent=67 // pred_region
          %424 = dma.done [#allocation11], 2048
        $region76: #{seq2seq_forward.3} parent=67 // pred_fallthru
          _
        // Predicated region
        $region77: #{seq2seq_forward.3} parent=67 // pred_check
          %p425 = pneg %p243
        $region78: #{seq2seq_forward.3} parent=67 // pred_check_branch
          %427 = sbr.rel (%p425) target = $region80
        $region79: #{seq2seq_forward.3} parent=67 // pred_region
          %428 = dma.done [#allocation11], 2048
        $region80: #{seq2seq_forward.3} parent=67 // pred_fallthru
          _
        // Predicated region
        $region81: #{seq2seq_forward.3} parent=67 // pred_check
          %p429 = pneg %p264
        $region82: #{seq2seq_forward.3} parent=67 // pred_check_branch
          %431 = sbr.rel (%p429) target = $region84
        $region83: #{seq2seq_forward.3} parent=67 // pred_region
          %432 = dma.done [#allocation14], 2048
        $region84: #{seq2seq_forward.3} parent=67 // pred_fallthru
          _
        %p433 = scmp.lt.s32.totalorder %s33, 3
        %s434 = scalar_select %p433, %s33, 3
        %s435 = smul.addr %s434, 8
        %s436 = scalar_lea.vmem %s1, %s435
        %p437 = pneg %p54
        %p438 = pneg %p51
        %p439 = pneg %p75
        %p440 = pneg %p72
        %p441 = pneg %p96
        %p442 = pneg %p93
        %p443 = pneg %p117
        %p444 = pneg %p114
        %p445 = pneg %p138
        %p446 = pneg %p135
        %p447 = pneg %p159
        %p448 = pneg %p156
        %p449 = pneg %p180
        %p450 = pneg %p177
        %p451 = pneg %p201
        %p452 = pneg %p198
        %p453 = pneg %p222
        %p454 = pneg %p219
        %p455 = pneg %p243
        %p456 = pneg %p240
        %p457 = pneg %p264
        %p458 = pneg %p261
        %p459 = pneg %p285
        %p460 = pneg %p282
        %p461 = pneg %p311
        %p462 = pneg %p308
        %p463 = scmp.lt.s32.totalorder %s33, 3
        %s464 = scalar_select %p463, %s33, 3
        %s465 = smul.addr %s464, 8
        %s466 = scalar_lea.vmem %s13, %s465
        %p467 = scmp.lt.s32.totalorder %s33, 3
        %s468 = scalar_select %p467, %s33, 3
        %s469 = smul.addr %s468, 8
        %s470 = scalar_lea.vmem %s1, %s469
        %p471 = scmp.lt.s32.totalorder %s33, 3
        %s472 = scalar_select %p471, %s33, 3
        %s473 = smul.addr %s472, 8
        %s474 = scalar_lea.vmem %s13, %s473
        %p475 = scmp.eq.s32.totalorder %s33, 0
        // Predicated region
        $region85: #{seq2seq_forward.3} parent=67 // pred_check
          %p476 = pneg %p475
        $region86: #{seq2seq_forward.3} parent=67 // pred_check_branch
          %478 = sbr.rel (%p476) target = $region88
        $region87: #{seq2seq_forward.3} parent=67 // pred_region
          %v479 = vld [vmem:[%s2] sm:$0xff]
          %480 = vst [vmem:[#allocation2] sm:$0xff] %v479
          %481 = vst [vmem:[#allocation3] sm:$0xff] 0.0
          %v482 = vld [vmem:[%s5] sm:$0xff]
          %v483 = vld [vmem:[%s5 + $0x8] sm:$0xff]
          %v484 = vld [vmem:[%s5 + $0x10] sm:$0xff]
          %v485 = vld [vmem:[%s5 + $0x18] sm:$0xff]
          %v486 = vld [vmem:[%s5 + $0x20] sm:$0xff]
          %v487 = vld [vmem:[%s5 + $0x28] sm:$0xff]
          %v488 = vld [vmem:[%s5 + $0x30] sm:$0xff]
          %v489 = vld [vmem:[%s5 + $0x38] sm:$0xff]
          %v490 = vld [vmem:[%s5 + $0x40] sm:$0xff]
          %v491 = vld [vmem:[%s5 + $0x48] sm:$0xff]
          %v492 = vld [vmem:[%s5 + $0x50] sm:$0xff]
          %v493 = vld [vmem:[%s5 + $0x58] sm:$0xff]
          %v494 = vld [vmem:[%s5 + $0x60] sm:$0xff]
          %v495 = vld [vmem:[%s5 + $0x68] sm:$0xff]
          %v496 = vld [vmem:[%s5 + $0x70] sm:$0xff]
          %v497 = vld [vmem:[%s5 + $0x78] sm:$0xff]
          %v498 = vld [vmem:[%s5 + $0x80] sm:$0xff]
          %v499 = vld [vmem:[%s5 + $0x88] sm:$0xff]
          %v500 = vld [vmem:[%s5 + $0x90] sm:$0xff]
          %v501 = vld [vmem:[%s5 + $0x98] sm:$0xff]
          %v502 = vld [vmem:[%s5 + $0xa0] sm:$0xff]
          %v503 = vld [vmem:[%s5 + $0xa8] sm:$0xff]
          %v504 = vld [vmem:[%s5 + $0xb0] sm:$0xff]
          %v505 = vld [vmem:[%s5 + $0xb8] sm:$0xff]
          %v506 = vld [vmem:[%s5 + $0xc0] sm:$0xff]
          %v507 = vld [vmem:[%s5 + $0xc8] sm:$0xff]
          %v508 = vld [vmem:[%s5 + $0xd0] sm:$0xff]
          %v509 = vld [vmem:[%s5 + $0xd8] sm:$0xff]
          %v510 = vld [vmem:[%s5 + $0xe0] sm:$0xff]
          %v511 = vld [vmem:[%s5 + $0xe8] sm:$0xff]
          %v512 = vld [vmem:[%s5 + $0xf0] sm:$0xff]
          %v513 = vld [vmem:[%s5 + $0xf8] sm:$0xff]
          %v514 = vld [vmem:[%s5 + $0x100] sm:$0xff]
          %v515 = vld [vmem:[%s5 + $0x108] sm:$0xff]
          %v516 = vld [vmem:[%s5 + $0x110] sm:$0xff]
          %v517 = vld [vmem:[%s5 + $0x118] sm:$0xff]
          %v518 = vld [vmem:[%s5 + $0x120] sm:$0xff]
          %v519 = vld [vmem:[%s5 + $0x128] sm:$0xff]
          %v520 = vld [vmem:[%s5 + $0x130] sm:$0xff]
          %v521 = vld [vmem:[%s5 + $0x138] sm:$0xff]
          %v522 = vld [vmem:[%s5 + $0x140] sm:$0xff]
          %v523 = vld [vmem:[%s5 + $0x148] sm:$0xff]
          %v524 = vld [vmem:[%s5 + $0x150] sm:$0xff]
          %v525 = vld [vmem:[%s5 + $0x158] sm:$0xff]
          %v526 = vld [vmem:[%s5 + $0x160] sm:$0xff]
          %v527 = vld [vmem:[%s5 + $0x168] sm:$0xff]
          %v528 = vld [vmem:[%s5 + $0x170] sm:$0xff]
          %v529 = vld [vmem:[%s5 + $0x178] sm:$0xff]
          %v530 = vld [vmem:[%s7] sm:$0x7]
          %v532 = vlaneseq
          %v533 = vshrl.u32 %v532, 7
          %v534 = vsub.s32 0, %v533
          %v535 = vrot.slane %v530, %v534
          %v536 = vlaneseq
          %v537 = vshrl.u32 %v536, 7
          %v538 = vsub.s32 1, %v537
          %v539 = vrot.slane %v530, %v538
          %v540 = vlaneseq
          %v541 = vshrl.u32 %v540, 7
          %v542 = vsub.s32 2, %v541
          %v543 = vrot.slane %v530, %v542
          %547 = vmatprep.subr.mxu0 %v528
          %548 = vmatpush1.msra.mxu0 %v527
          %549 = vmatprep.subr.mxu0 %v525
          %550 = vmatpush1.msra.mxu0 %v524
          %551 = vmatprep.subr.mxu0 %v522
          %552 = vmatpush1.msra.mxu0 %v521
          %553 = vmatprep.subr.mxu0 %v519
          %554 = vmatpush1.msra.mxu0 %v518
          %555 = vmatprep.subr.mxu0 %v516
          %556 = vmatpush1.msra.mxu0 %v515
          %557 = vmatprep.subr.mxu0 %v513
          %558 = vmatpush1.msra.mxu0 %v512
          %559 = vmatprep.subr.mxu0 %v510
          %560 = vmatpush1.msra.mxu0 %v509
          %561 = vmatprep.subr.mxu0 %v507
          %562 = vmatpush1.msra.mxu0 %v506
          %563 = vmatprep.subr.mxu0 %v504
          %564 = vmatpush1.msra.mxu0 %v503
          %565 = vmatprep.subr.mxu0 %v501
          %566 = vmatpush1.msra.mxu0 %v500
          %567 = vmatprep.subr.mxu0 %v498
          %568 = vmatpush1.msra.mxu0 %v497
          %569 = vmatprep.subr.mxu0 %v495
          %570 = vmatpush1.msra.mxu0 %v494
          %571 = vmatprep.subr.mxu0 %v492
          %572 = vmatpush1.msra.mxu0 %v491
          %573 = vmatprep.subr.mxu0 %v489
          %574 = vmatpush1.msra.mxu0 %v488
          %575 = vmatprep.subr.mxu0 %v486
          %576 = vmatpush1.msra.mxu0 %v485
          %577 = vmatprep.subr.mxu0 %v483
          %578 = vmatpush1.msra.mxu0 %v482
          %579 = vmatprep.subr.mxu0 0.0
          %580 = vmatpush2.msra.mxu0 0.0
          %581 = vmatprep.subr.mxu0 0.0
          %582 = vmatpush2.msra.mxu0 0.0
          %583 = vmatprep.subr.mxu0 0.0
          %584 = vmatpush2.msra.mxu0 0.0
          %585 = vmatprep.subr.mxu0 0.0
          %586 = vmatpush2.msra.mxu0 0.0
          %587 = vmatprep.subr.mxu0 0.0
          %588 = vmatpush2.msra.mxu0 0.0
          %589 = vmatprep.subr.mxu0 0.0
          %590 = vmatpush2.msra.mxu0 0.0
          %591 = vmatprep.subr.mxu0 0.0
          %592 = vmatpush2.msra.mxu0 0.0
          %593 = vmatprep.subr.mxu0 0.0
          %594 = vmatpush2.msra.mxu0 0.0
          %595 = vmatprep.subr.mxu0 0.0
          %596 = vmatpush2.msra.mxu0 0.0
          %597 = vmatprep.subr.mxu0 0.0
          %598 = vmatpush2.msra.mxu0 0.0
          %599 = vmatprep.subr.mxu0 0.0
          %600 = vmatpush2.msra.mxu0 0.0
          %601 = vmatprep.subr.mxu0 0.0
          %602 = vmatpush2.msra.mxu0 0.0
          %603 = vmatprep.subr.mxu0 0.0
          %604 = vmatpush2.msra.mxu0 0.0
          %605 = vmatprep.subr.mxu0 0.0
          %606 = vmatpush2.msra.mxu0 0.0
          %607 = vmatprep.subr.mxu0 0.0
          %608 = vmatpush2.msra.mxu0 0.0
          %609 = vmatprep.subr.mxu0 0.0
          %610 = vmatpush2.msra.mxu0 0.0
          %611 = vmatprep.mubr.f32.mxu0 0.0
          %612 = vmatmul.mubr.f32.gmra.mxu0 %v479
          %v613 = vpop.f32.mrf.mxu0
          %v614 = vadd.f32 %v535, %v613
          %v615 = vpop.f32.mrf.mxu0
          %v616 = vadd.f32 %v539, %v615
          %617 = vdwg.mxu0
          %618 = vmatprep.subr.mxu0 0.0
          %619 = vmatpush1.msra.mxu0 %v529
          %620 = vmatprep.subr.mxu0 0.0
          %621 = vmatpush1.msra.mxu0 %v526
          %622 = vmatprep.subr.mxu0 0.0
          %623 = vmatpush1.msra.mxu0 %v523
          %624 = vmatprep.subr.mxu0 0.0
          %625 = vmatpush1.msra.mxu0 %v520
          %626 = vmatprep.subr.mxu0 0.0
          %627 = vmatpush1.msra.mxu0 %v517
          %628 = vmatprep.subr.mxu0 0.0
          %629 = vmatpush1.msra.mxu0 %v514
          %630 = vmatprep.subr.mxu0 0.0
          %631 = vmatpush1.msra.mxu0 %v511
          %632 = vmatprep.subr.mxu0 0.0
          %633 = vmatpush1.msra.mxu0 %v508
          %634 = vmatprep.subr.mxu0 0.0
          %635 = vmatpush1.msra.mxu0 %v505
          %636 = vmatprep.subr.mxu0 0.0
          %637 = vmatpush1.msra.mxu0 %v502
          %638 = vmatprep.subr.mxu0 0.0
          %639 = vmatpush1.msra.mxu0 %v499
          %640 = vmatprep.subr.mxu0 0.0
          %641 = vmatpush1.msra.mxu0 %v496
          %642 = vmatprep.subr.mxu0 0.0
          %643 = vmatpush1.msra.mxu0 %v493
          %644 = vmatprep.subr.mxu0 0.0
          %645 = vmatpush1.msra.mxu0 %v490
          %646 = vmatprep.subr.mxu0 0.0
          %647 = vmatpush1.msra.mxu0 %v487
          %648 = vmatprep.subr.mxu0 0.0
          %649 = vmatpush1.msra.mxu0 %v484
          %650 = vmatprep.subr.mxu0 0.0
          %651 = vmatpush2.msra.mxu0 0.0
          %652 = vmatprep.subr.mxu0 0.0
          %653 = vmatpush2.msra.mxu0 0.0
          %654 = vmatprep.subr.mxu0 0.0
          %655 = vmatpush2.msra.mxu0 0.0
          %656 = vmatprep.subr.mxu0 0.0
          %657 = vmatpush2.msra.mxu0 0.0
          %658 = vmatprep.subr.mxu0 0.0
          %659 = vmatpush2.msra.mxu0 0.0
          %660 = vmatprep.subr.mxu0 0.0
          %661 = vmatpush2.msra.mxu0 0.0
          %662 = vmatprep.subr.mxu0 0.0
          %663 = vmatpush2.msra.mxu0 0.0
          %664 = vmatprep.subr.mxu0 0.0
          %665 = vmatpush2.msra.mxu0 0.0
          %666 = vmatprep.subr.mxu0 0.0
          %667 = vmatpush2.msra.mxu0 0.0
          %668 = vmatprep.subr.mxu0 0.0
          %669 = vmatpush2.msra.mxu0 0.0
          %670 = vmatprep.subr.mxu0 0.0
          %671 = vmatpush2.msra.mxu0 0.0
          %672 = vmatprep.subr.mxu0 0.0
          %673 = vmatpush2.msra.mxu0 0.0
          %674 = vmatprep.subr.mxu0 0.0
          %675 = vmatpush2.msra.mxu0 0.0
          %676 = vmatprep.subr.mxu0 0.0
          %677 = vmatpush2.msra.mxu0 0.0
          %678 = vmatprep.subr.mxu0 0.0
          %679 = vmatpush2.msra.mxu0 0.0
          %680 = vmatprep.subr.mxu0 0.0
          %681 = vmatpush2.msra.mxu0 0.0
          %682 = vmatprep.mubr.f32.mxu0 0.0
          %683 = vmatmul.mubr.f32.gmra.mxu0 %v479
          %v684 = vpop.f32.mrf.mxu0
          %v685 = vadd.f32 %v543, %v684
          %v686 = vpop.f32.mrf.mxu0
          %687 = vdwg.mxu0
          %688 = vst [vmem:[#allocation4] sm:$0xff] %v614
          %689 = vst [vmem:[#allocation4 + $0x8] sm:$0xff] %v616
          %690 = vst [vmem:[#allocation4 + $0x10] sm:$0xff] %v685
          %v691 = vld [vmem:[#allocation12] sm:$0xff]
          %v692 = vld [vmem:[#allocation12 + $0x8] sm:$0xff]
          %v693 = vld [vmem:[#allocation12 + $0x10] sm:$0xff]
          %v694 = vld [vmem:[#allocation12 + $0x18] sm:$0xff]
          %v695 = vld [vmem:[#allocation12 + $0x20] sm:$0xff]
          %v696 = vld [vmem:[#allocation12 + $0x28] sm:$0xff]
          %v697 = vld [vmem:[#allocation12 + $0x30] sm:$0xff]
          %v698 = vld [vmem:[#allocation12 + $0x38] sm:$0xff]
          %v699 = vld [vmem:[#allocation12 + $0x40] sm:$0xff]
          %v700 = vld [vmem:[#allocation12 + $0x48] sm:$0xff]
          %v701 = vld [vmem:[#allocation12 + $0x50] sm:$0xff]
          %v702 = vld [vmem:[#allocation12 + $0x58] sm:$0xff]
          %v703 = vld [vmem:[#allocation12 + $0x60] sm:$0xff]
          %v704 = vld [vmem:[#allocation12 + $0x68] sm:$0xff]
          %v705 = vld [vmem:[#allocation12 + $0x70] sm:$0xff]
          %v706 = vld [vmem:[#allocation12 + $0x78] sm:$0xff]
          %v707 = vld [vmem:[%s12] sm:$0x1]
          %v709 = vlaneseq
          %v710 = vshrl.u32 %v709, 7
          %v711 = vsub.s32 0, %v710
          %v712 = vrot.slane %v707, %v711
          %714 = vmatprep.subr.mxu0 0.0
          %715 = vmatpush1.msra.mxu0 %v706
          %716 = vmatprep.subr.mxu0 0.0
          %717 = vmatpush1.msra.mxu0 %v705
          %718 = vmatprep.subr.mxu0 0.0
          %719 = vmatpush1.msra.mxu0 %v704
          %720 = vmatprep.subr.mxu0 0.0
          %721 = vmatpush1.msra.mxu0 %v703
          %722 = vmatprep.subr.mxu0 0.0
          %723 = vmatpush1.msra.mxu0 %v702
          %724 = vmatprep.subr.mxu0 0.0
          %725 = vmatpush1.msra.mxu0 %v701
          %726 = vmatprep.subr.mxu0 0.0
          %727 = vmatpush1.msra.mxu0 %v700
          %728 = vmatprep.subr.mxu0 0.0
          %729 = vmatpush1.msra.mxu0 %v699
          %730 = vmatprep.subr.mxu0 0.0
          %731 = vmatpush1.msra.mxu0 %v698
          %732 = vmatprep.subr.mxu0 0.0
          %733 = vmatpush1.msra.mxu0 %v697
          %734 = vmatprep.subr.mxu0 0.0
          %735 = vmatpush1.msra.mxu0 %v696
          %736 = vmatprep.subr.mxu0 0.0
          %737 = vmatpush1.msra.mxu0 %v695
          %738 = vmatprep.subr.mxu0 0.0
          %739 = vmatpush1.msra.mxu0 %v694
          %740 = vmatprep.subr.mxu0 0.0
          %741 = vmatpush1.msra.mxu0 %v693
          %742 = vmatprep.subr.mxu0 0.0
          %743 = vmatpush1.msra.mxu0 %v692
          %744 = vmatprep.subr.mxu0 0.0
          %745 = vmatpush1.msra.mxu0 %v691
          %746 = vmatprep.subr.mxu0 0.0
          %747 = vmatpush2.msra.mxu0 0.0
          %748 = vmatprep.subr.mxu0 0.0
          %749 = vmatpush2.msra.mxu0 0.0
          %750 = vmatprep.subr.mxu0 0.0
          %751 = vmatpush2.msra.mxu0 0.0
          %752 = vmatprep.subr.mxu0 0.0
          %753 = vmatpush2.msra.mxu0 0.0
          %754 = vmatprep.subr.mxu0 0.0
          %755 = vmatpush2.msra.mxu0 0.0
          %756 = vmatprep.subr.mxu0 0.0
          %757 = vmatpush2.msra.mxu0 0.0
          %758 = vmatprep.subr.mxu0 0.0
          %759 = vmatpush2.msra.mxu0 0.0
          %760 = vmatprep.subr.mxu0 0.0
          %761 = vmatpush2.msra.mxu0 0.0
          %762 = vmatprep.subr.mxu0 0.0
          %763 = vmatpush2.msra.mxu0 0.0
          %764 = vmatprep.subr.mxu0 0.0
          %765 = vmatpush2.msra.mxu0 0.0
          %766 = vmatprep.subr.mxu0 0.0
          %767 = vmatpush2.msra.mxu0 0.0
          %768 = vmatprep.subr.mxu0 0.0
          %769 = vmatpush2.msra.mxu0 0.0
          %770 = vmatprep.subr.mxu0 0.0
          %771 = vmatpush2.msra.mxu0 0.0
          %772 = vmatprep.subr.mxu0 0.0
          %773 = vmatpush2.msra.mxu0 0.0
          %774 = vmatprep.subr.mxu0 0.0
          %775 = vmatpush2.msra.mxu0 0.0
          %776 = vmatprep.subr.mxu0 0.0
          %777 = vmatpush2.msra.mxu0 0.0
          %778 = vmatprep.mubr.f32.mxu0 0.0
          %779 = vmatmul.mubr.f32.gmra.mxu0 %v479
          %v780 = vpop.f32.mrf.mxu0
          %v781 = vadd.f32 %v712, %v780
          %v782 = vpop.f32.mrf.mxu0
          %783 = vdwg.mxu0
          %784 = vst [vmem:[#allocation5] sm:$0xff] %v781
        $region88: #{seq2seq_forward.3} parent=67 // pred_fallthru
          _
        %s785 = sld [smem:[#allocation7 + %s33]]
        %p786 = scmp.eq.s32.totalorder %s785, 1
        %s787 = scalar_select %p786, 1, 0
        %s788 = scvt.s32.f32 %s787
        %v789 = vld [vmem:[%s470] sm:$0xff]
        %v790 = vstv %s788
        %v791 = vmul.f32 %v790, %v789
        %s792 = ssub.f32 1.0, %s788
        %v793 = vld [vmem:[#allocation3] sm:$0xff]
        %v794 = vstv %s792
        %v795 = vmul.f32 %v794, %v793
        %v796 = vadd.f32 %v791, %v795
        %v797 = vld [vmem:[#allocation8] sm:$0xff]
        %v798 = vld [vmem:[#allocation8 + $0x8] sm:$0xff]
        %v799 = vld [vmem:[#allocation8 + $0x10] sm:$0xff]
        %v800 = vld [vmem:[#allocation8 + $0x18] sm:$0xff]
        %v801 = vld [vmem:[#allocation8 + $0x20] sm:$0xff]
        %v802 = vld [vmem:[#allocation8 + $0x28] sm:$0xff]
        %v803 = vld [vmem:[#allocation8 + $0x30] sm:$0xff]
        %v804 = vld [vmem:[#allocation8 + $0x38] sm:$0xff]
        %v805 = vld [vmem:[#allocation8 + $0x40] sm:$0xff]
        %v806 = vld [vmem:[#allocation8 + $0x48] sm:$0xff]
        %v807 = vld [vmem:[#allocation8 + $0x50] sm:$0xff]
        %v808 = vld [vmem:[#allocation8 + $0x58] sm:$0xff]
        %v809 = vld [vmem:[#allocation8 + $0x60] sm:$0xff]
        %v810 = vld [vmem:[#allocation8 + $0x68] sm:$0xff]
        %v811 = vld [vmem:[#allocation8 + $0x70] sm:$0xff]
        %v812 = vld [vmem:[#allocation8 + $0x78] sm:$0xff]
        %813 = vmatprep.subr.mxu0 0.0
        %814 = vmatpush1.msra.mxu0 %v812
        %815 = vmatprep.subr.mxu0 0.0
        %816 = vmatpush1.msra.mxu0 %v811
        %817 = vmatprep.subr.mxu0 0.0
        %818 = vmatpush1.msra.mxu0 %v810
        %819 = vmatprep.subr.mxu0 0.0
        %820 = vmatpush1.msra.mxu0 %v809
        %821 = vmatprep.subr.mxu0 0.0
        %822 = vmatpush1.msra.mxu0 %v808
        %823 = vmatprep.subr.mxu0 0.0
        %824 = vmatpush1.msra.mxu0 %v807
        %825 = vmatprep.subr.mxu0 0.0
        %826 = vmatpush1.msra.mxu0 %v806
        %827 = vmatprep.subr.mxu0 0.0
        %828 = vmatpush1.msra.mxu0 %v805
        %829 = vmatprep.subr.mxu0 0.0
        %830 = vmatpush1.msra.mxu0 %v804
        %831 = vmatprep.subr.mxu0 0.0
        %832 = vmatpush1.msra.mxu0 %v803
        %833 = vmatprep.subr.mxu0 0.0
        %834 = vmatpush1.msra.mxu0 %v802
        %835 = vmatprep.subr.mxu0 0.0
        %836 = vmatpush1.msra.mxu0 %v801
        %837 = vmatprep.subr.mxu0 0.0
        %838 = vmatpush1.msra.mxu0 %v800
        %839 = vmatprep.subr.mxu0 0.0
        %840 = vmatpush1.msra.mxu0 %v799
        %841 = vmatprep.subr.mxu0 0.0
        %842 = vmatpush1.msra.mxu0 %v798
        %843 = vmatprep.subr.mxu0 0.0
        %844 = vmatpush1.msra.mxu0 %v797
        %845 = vmatprep.subr.mxu0 0.0
        %846 = vmatpush2.msra.mxu0 0.0
        %847 = vmatprep.subr.mxu0 0.0
        %848 = vmatpush2.msra.mxu0 0.0
        %849 = vmatprep.subr.mxu0 0.0
        %850 = vmatpush2.msra.mxu0 0.0
        %851 = vmatprep.subr.mxu0 0.0
        %852 = vmatpush2.msra.mxu0 0.0
        %853 = vmatprep.subr.mxu0 0.0
        %854 = vmatpush2.msra.mxu0 0.0
        %855 = vmatprep.subr.mxu0 0.0
        %856 = vmatpush2.msra.mxu0 0.0
        %857 = vmatprep.subr.mxu0 0.0
        %858 = vmatpush2.msra.mxu0 0.0
        %859 = vmatprep.subr.mxu0 0.0
        %860 = vmatpush2.msra.mxu0 0.0
        %861 = vmatprep.subr.mxu0 0.0
        %862 = vmatpush2.msra.mxu0 0.0
        %863 = vmatprep.subr.mxu0 0.0
        %864 = vmatpush2.msra.mxu0 0.0
        %865 = vmatprep.subr.mxu0 0.0
        %866 = vmatpush2.msra.mxu0 0.0
        %867 = vmatprep.subr.mxu0 0.0
        %868 = vmatpush2.msra.mxu0 0.0
        %869 = vmatprep.subr.mxu0 0.0
        %870 = vmatpush2.msra.mxu0 0.0
        %871 = vmatprep.subr.mxu0 0.0
        %872 = vmatpush2.msra.mxu0 0.0
        %873 = vmatprep.subr.mxu0 0.0
        %874 = vmatpush2.msra.mxu0 0.0
        %875 = vmatprep.subr.mxu0 0.0
        %876 = vmatpush2.msra.mxu0 0.0
        %877 = vmatprep.mubr.f32.mxu0 0.0
        %878 = vmatmul.mubr.f32.gmra.mxu0 %v796
        %v879 = vpop.f32.mrf.mxu0
        %v880 = vadd.f32 0.0, %v879
        %v881 = vpop.f32.mrf.mxu0
        %882 = vdwg.mxu0
        %v883 = vld [vmem:[#allocation2] sm:$0xff]
        %v884 = vld [vmem:[%s4] sm:$0xff]
        %v885 = vld [vmem:[%s4 + $0x8] sm:$0xff]
        %v886 = vld [vmem:[%s4 + $0x10] sm:$0xff]
        %v887 = vld [vmem:[%s4 + $0x18] sm:$0xff]
        %v888 = vld [vmem:[%s4 + $0x20] sm:$0xff]
        %v889 = vld [vmem:[%s4 + $0x28] sm:$0xff]
        %v890 = vld [vmem:[%s4 + $0x30] sm:$0xff]
        %v891 = vld [vmem:[%s4 + $0x38] sm:$0xff]
        %v892 = vld [vmem:[%s4 + $0x40] sm:$0xff]
        %v893 = vld [vmem:[%s4 + $0x48] sm:$0xff]
        %v894 = vld [vmem:[%s4 + $0x50] sm:$0xff]
        %v895 = vld [vmem:[%s4 + $0x58] sm:$0xff]
        %v896 = vld [vmem:[%s4 + $0x60] sm:$0xff]
        %v897 = vld [vmem:[%s4 + $0x68] sm:$0xff]
        %v898 = vld [vmem:[%s4 + $0x70] sm:$0xff]
        %v899 = vld [vmem:[%s4 + $0x78] sm:$0xff]
        %v900 = vld [vmem:[%s4 + $0x80] sm:$0xff]
        %v901 = vld [vmem:[%s4 + $0x88] sm:$0xff]
        %v902 = vld [vmem:[%s4 + $0x90] sm:$0xff]
        %v903 = vld [vmem:[%s4 + $0x98] sm:$0xff]
        %v904 = vld [vmem:[%s4 + $0xa0] sm:$0xff]
        %v905 = vld [vmem:[%s4 + $0xa8] sm:$0xff]
        %v906 = vld [vmem:[%s4 + $0xb0] sm:$0xff]
        %v907 = vld [vmem:[%s4 + $0xb8] sm:$0xff]
        %v908 = vld [vmem:[%s4 + $0xc0] sm:$0xff]
        %v909 = vld [vmem:[%s4 + $0xc8] sm:$0xff]
        %v910 = vld [vmem:[%s4 + $0xd0] sm:$0xff]
        %v911 = vld [vmem:[%s4 + $0xd8] sm:$0xff]
        %v912 = vld [vmem:[%s4 + $0xe0] sm:$0xff]
        %v913 = vld [vmem:[%s4 + $0xe8] sm:$0xff]
        %v914 = vld [vmem:[%s4 + $0xf0] sm:$0xff]
        %v915 = vld [vmem:[%s4 + $0xf8] sm:$0xff]
        %v916 = vld [vmem:[%s4 + $0x100] sm:$0xff]
        %v917 = vld [vmem:[%s4 + $0x108] sm:$0xff]
        %v918 = vld [vmem:[%s4 + $0x110] sm:$0xff]
        %v919 = vld [vmem:[%s4 + $0x118] sm:$0xff]
        %v920 = vld [vmem:[%s4 + $0x120] sm:$0xff]
        %v921 = vld [vmem:[%s4 + $0x128] sm:$0xff]
        %v922 = vld [vmem:[%s4 + $0x130] sm:$0xff]
        %v923 = vld [vmem:[%s4 + $0x138] sm:$0xff]
        %v924 = vld [vmem:[%s4 + $0x140] sm:$0xff]
        %v925 = vld [vmem:[%s4 + $0x148] sm:$0xff]
        %v926 = vld [vmem:[%s4 + $0x150] sm:$0xff]
        %v927 = vld [vmem:[%s4 + $0x158] sm:$0xff]
        %v928 = vld [vmem:[%s4 + $0x160] sm:$0xff]
        %v929 = vld [vmem:[%s4 + $0x168] sm:$0xff]
        %v930 = vld [vmem:[%s4 + $0x170] sm:$0xff]
        %v931 = vld [vmem:[%s4 + $0x178] sm:$0xff]
        %v932 = vld [vmem:[#allocation4] sm:$0xff]
        %v933 = vld [vmem:[#allocation4 + $0x8] sm:$0xff]
        %v934 = vld [vmem:[#allocation4 + $0x10] sm:$0xff]
        %935 = vmatprep.subr.mxu0 %v930
        %936 = vmatpush1.msra.mxu0 %v929
        %937 = vmatprep.subr.mxu0 %v927
        %938 = vmatpush1.msra.mxu0 %v926
        %939 = vmatprep.subr.mxu0 %v924
        %940 = vmatpush1.msra.mxu0 %v923
        %941 = vmatprep.subr.mxu0 %v921
        %942 = vmatpush1.msra.mxu0 %v920
        %943 = vmatprep.subr.mxu0 %v918
        %944 = vmatpush1.msra.mxu0 %v917
        %945 = vmatprep.subr.mxu0 %v915
        %946 = vmatpush1.msra.mxu0 %v914
        %947 = vmatprep.subr.mxu0 %v912
        %948 = vmatpush1.msra.mxu0 %v911
        %949 = vmatprep.subr.mxu0 %v909
        %950 = vmatpush1.msra.mxu0 %v908
        %951 = vmatprep.subr.mxu0 %v906
        %952 = vmatpush1.msra.mxu0 %v905
        %953 = vmatprep.subr.mxu0 %v903
        %954 = vmatpush1.msra.mxu0 %v902
        %955 = vmatprep.subr.mxu0 %v900
        %956 = vmatpush1.msra.mxu0 %v899
        %957 = vmatprep.subr.mxu0 %v897
        %958 = vmatpush1.msra.mxu0 %v896
        %959 = vmatprep.subr.mxu0 %v894
        %960 = vmatpush1.msra.mxu0 %v893
        %961 = vmatprep.subr.mxu0 %v891
        %962 = vmatpush1.msra.mxu0 %v890
        %963 = vmatprep.subr.mxu0 %v888
        %964 = vmatpush1.msra.mxu0 %v887
        %965 = vmatprep.subr.mxu0 %v885
        %966 = vmatpush1.msra.mxu0 %v884
        %967 = vmatprep.subr.mxu0 0.0
        %968 = vmatpush2.msra.mxu0 0.0
        %969 = vmatprep.subr.mxu0 0.0
        %970 = vmatpush2.msra.mxu0 0.0
        %971 = vmatprep.subr.mxu0 0.0
        %972 = vmatpush2.msra.mxu0 0.0
        %973 = vmatprep.subr.mxu0 0.0
        %974 = vmatpush2.msra.mxu0 0.0
        %975 = vmatprep.subr.mxu0 0.0
        %976 = vmatpush2.msra.mxu0 0.0
        %977 = vmatprep.subr.mxu0 0.0
        %978 = vmatpush2.msra.mxu0 0.0
        %979 = vmatprep.subr.mxu0 0.0
        %980 = vmatpush2.msra.mxu0 0.0
        %981 = vmatprep.subr.mxu0 0.0
        %982 = vmatpush2.msra.mxu0 0.0
        %983 = vmatprep.subr.mxu0 0.0
        %984 = vmatpush2.msra.mxu0 0.0
        %985 = vmatprep.subr.mxu0 0.0
        %986 = vmatpush2.msra.mxu0 0.0
        %987 = vmatprep.subr.mxu0 0.0
        %988 = vmatpush2.msra.mxu0 0.0
        %989 = vmatprep.subr.mxu0 0.0
        %990 = vmatpush2.msra.mxu0 0.0
        %991 = vmatprep.subr.mxu0 0.0
        %992 = vmatpush2.msra.mxu0 0.0
        %993 = vmatprep.subr.mxu0 0.0
        %994 = vmatpush2.msra.mxu0 0.0
        %995 = vmatprep.subr.mxu0 0.0
        %996 = vmatpush2.msra.mxu0 0.0
        %997 = vmatprep.subr.mxu0 0.0
        %998 = vmatpush2.msra.mxu0 0.0
        %999 = vmatprep.mubr.f32.mxu0 0.0
        %1000 = vmatmul.mubr.f32.gmra.mxu0 %v880
        %v1001 = vpop.f32.mrf.mxu0
        %v1002 = vadd.f32 %v932, %v1001
        %v1003 = vpop.f32.mrf.mxu0
        %v1004 = vadd.f32 %v933, %v1003
        %1005 = vdwg.mxu0
        %1006 = vmatprep.subr.mxu0 0.0
        %1007 = vmatpush1.msra.mxu0 %v931
        %1008 = vmatprep.subr.mxu0 0.0
        %1009 = vmatpush1.msra.mxu0 %v928
        %1010 = vmatprep.subr.mxu0 0.0
        %1011 = vmatpush1.msra.mxu0 %v925
        %1012 = vmatprep.subr.mxu0 0.0
        %1013 = vmatpush1.msra.mxu0 %v922
        %1014 = vmatprep.subr.mxu0 0.0
        %1015 = vmatpush1.msra.mxu0 %v919
        %1016 = vmatprep.subr.mxu0 0.0
        %1017 = vmatpush1.msra.mxu0 %v916
        %1018 = vmatprep.subr.mxu0 0.0
        %1019 = vmatpush1.msra.mxu0 %v913
        %1020 = vmatprep.subr.mxu0 0.0
        %1021 = vmatpush1.msra.mxu0 %v910
        %1022 = vmatprep.subr.mxu0 0.0
        %1023 = vmatpush1.msra.mxu0 %v907
        %1024 = vmatprep.subr.mxu0 0.0
        %1025 = vmatpush1.msra.mxu0 %v904
        %1026 = vmatprep.subr.mxu0 0.0
        %1027 = vmatpush1.msra.mxu0 %v901
        %1028 = vmatprep.subr.mxu0 0.0
        %1029 = vmatpush1.msra.mxu0 %v898
        %1030 = vmatprep.subr.mxu0 0.0
        %1031 = vmatpush1.msra.mxu0 %v895
        %1032 = vmatprep.subr.mxu0 0.0
        %1033 = vmatpush1.msra.mxu0 %v892
        %1034 = vmatprep.subr.mxu0 0.0
        %1035 = vmatpush1.msra.mxu0 %v889
        %1036 = vmatprep.subr.mxu0 0.0
        %1037 = vmatpush1.msra.mxu0 %v886
        %1038 = vmatprep.subr.mxu0 0.0
        %1039 = vmatpush2.msra.mxu0 0.0
        %1040 = vmatprep.subr.mxu0 0.0
        %1041 = vmatpush2.msra.mxu0 0.0
        %1042 = vmatprep.subr.mxu0 0.0
        %1043 = vmatpush2.msra.mxu0 0.0
        %1044 = vmatprep.subr.mxu0 0.0
        %1045 = vmatpush2.msra.mxu0 0.0
        %1046 = vmatprep.subr.mxu0 0.0
        %1047 = vmatpush2.msra.mxu0 0.0
        %1048 = vmatprep.subr.mxu0 0.0
        %1049 = vmatpush2.msra.mxu0 0.0
        %1050 = vmatprep.subr.mxu0 0.0
        %1051 = vmatpush2.msra.mxu0 0.0
        %1052 = vmatprep.subr.mxu0 0.0
        %1053 = vmatpush2.msra.mxu0 0.0
        %1054 = vmatprep.subr.mxu0 0.0
        %1055 = vmatpush2.msra.mxu0 0.0
        %1056 = vmatprep.subr.mxu0 0.0
        %1057 = vmatpush2.msra.mxu0 0.0
        %1058 = vmatprep.subr.mxu0 0.0
        %1059 = vmatpush2.msra.mxu0 0.0
        %1060 = vmatprep.subr.mxu0 0.0
        %1061 = vmatpush2.msra.mxu0 0.0
        %1062 = vmatprep.subr.mxu0 0.0
        %1063 = vmatpush2.msra.mxu0 0.0
        %1064 = vmatprep.subr.mxu0 0.0
        %1065 = vmatpush2.msra.mxu0 0.0
        %1066 = vmatprep.subr.mxu0 0.0
        %1067 = vmatpush2.msra.mxu0 0.0
        %1068 = vmatprep.subr.mxu0 0.0
        %1069 = vmatpush2.msra.mxu0 0.0
        %1070 = vmatprep.mubr.f32.mxu0 0.0
        %1071 = vmatmul.mubr.f32.gmra.mxu0 %v880
        %v1072 = vpop.f32.mrf.mxu0
        %v1073 = vadd.f32 %v934, %v1072
        %v1074 = vpop.f32.mrf.mxu0
        %1075 = vdwg.mxu0
        %v1076 = vld [vmem:[%s6] sm:$0xff]
        %v1077 = vld [vmem:[%s6 + $0x8] sm:$0xff]
        %v1078 = vld [vmem:[%s6 + $0x10] sm:$0xff]
        %v1079 = vld [vmem:[%s6 + $0x18] sm:$0xff]
        %v1080 = vld [vmem:[%s6 + $0x20] sm:$0xff]
        %v1081 = vld [vmem:[%s6 + $0x28] sm:$0xff]
        %v1082 = vld [vmem:[%s6 + $0x30] sm:$0xff]
        %v1083 = vld [vmem:[%s6 + $0x38] sm:$0xff]
        %v1084 = vld [vmem:[%s6 + $0x40] sm:$0xff]
        %v1085 = vld [vmem:[%s6 + $0x48] sm:$0xff]
        %v1086 = vld [vmem:[%s6 + $0x50] sm:$0xff]
        %v1087 = vld [vmem:[%s6 + $0x58] sm:$0xff]
        %v1088 = vld [vmem:[%s6 + $0x60] sm:$0xff]
        %v1089 = vld [vmem:[%s6 + $0x68] sm:$0xff]
        %v1090 = vld [vmem:[%s6 + $0x70] sm:$0xff]
        %v1091 = vld [vmem:[%s6 + $0x78] sm:$0xff]
        %v1092 = vld [vmem:[%s6 + $0x80] sm:$0xff]
        %v1093 = vld [vmem:[%s6 + $0x88] sm:$0xff]
        %v1094 = vld [vmem:[%s6 + $0x90] sm:$0xff]
        %v1095 = vld [vmem:[%s6 + $0x98] sm:$0xff]
        %v1096 = vld [vmem:[%s6 + $0xa0] sm:$0xff]
        %v1097 = vld [vmem:[%s6 + $0xa8] sm:$0xff]
        %v1098 = vld [vmem:[%s6 + $0xb0] sm:$0xff]
        %v1099 = vld [vmem:[%s6 + $0xb8] sm:$0xff]
        %v1100 = vld [vmem:[%s6 + $0xc0] sm:$0xff]
        %v1101 = vld [vmem:[%s6 + $0xc8] sm:$0xff]
        %v1102 = vld [vmem:[%s6 + $0xd0] sm:$0xff]
        %v1103 = vld [vmem:[%s6 + $0xd8] sm:$0xff]
        %v1104 = vld [vmem:[%s6 + $0xe0] sm:$0xff]
        %v1105 = vld [vmem:[%s6 + $0xe8] sm:$0xff]
        %v1106 = vld [vmem:[%s6 + $0xf0] sm:$0xff]
        %v1107 = vld [vmem:[%s6 + $0xf8] sm:$0xff]
        %v1108 = vld [vmem:[%s6 + $0x100] sm:$0xff]
        %v1109 = vld [vmem:[%s6 + $0x108] sm:$0xff]
        %v1110 = vld [vmem:[%s6 + $0x110] sm:$0xff]
        %v1111 = vld [vmem:[%s6 + $0x118] sm:$0xff]
        %v1112 = vld [vmem:[%s6 + $0x120] sm:$0xff]
        %v1113 = vld [vmem:[%s6 + $0x128] sm:$0xff]
        %v1114 = vld [vmem:[%s6 + $0x130] sm:$0xff]
        %v1115 = vld [vmem:[%s6 + $0x138] sm:$0xff]
        %v1116 = vld [vmem:[%s6 + $0x140] sm:$0xff]
        %v1117 = vld [vmem:[%s6 + $0x148] sm:$0xff]
        %v1118 = vld [vmem:[%s6 + $0x150] sm:$0xff]
        %v1119 = vld [vmem:[%s6 + $0x158] sm:$0xff]
        %v1120 = vld [vmem:[%s6 + $0x160] sm:$0xff]
        %v1121 = vld [vmem:[%s6 + $0x168] sm:$0xff]
        %v1122 = vld [vmem:[%s6 + $0x170] sm:$0xff]
        %v1123 = vld [vmem:[%s6 + $0x178] sm:$0xff]
        %v1124 = vld [vmem:[%s8] sm:$0x7]
        %v1126 = vlaneseq
        %v1127 = vshrl.u32 %v1126, 7
        %v1128 = vsub.s32 0, %v1127
        %v1129 = vrot.slane %v1124, %v1128
        %v1130 = vlaneseq
        %v1131 = vshrl.u32 %v1130, 7
        %v1132 = vsub.s32 1, %v1131
        %v1133 = vrot.slane %v1124, %v1132
        %v1134 = vlaneseq
        %v1135 = vshrl.u32 %v1134, 7
        %v1136 = vsub.s32 2, %v1135
        %v1137 = vrot.slane %v1124, %v1136
        %1141 = vmatprep.subr.mxu0 %v1122
        %1142 = vmatpush1.msra.mxu0 %v1121
        %1143 = vmatprep.subr.mxu0 %v1119
        %1144 = vmatpush1.msra.mxu0 %v1118
        %1145 = vmatprep.subr.mxu0 %v1116
        %1146 = vmatpush1.msra.mxu0 %v1115
        %1147 = vmatprep.subr.mxu0 %v1113
        %1148 = vmatpush1.msra.mxu0 %v1112
        %1149 = vmatprep.subr.mxu0 %v1110
        %1150 = vmatpush1.msra.mxu0 %v1109
        %1151 = vmatprep.subr.mxu0 %v1107
        %1152 = vmatpush1.msra.mxu0 %v1106
        %1153 = vmatprep.subr.mxu0 %v1104
        %1154 = vmatpush1.msra.mxu0 %v1103
        %1155 = vmatprep.subr.mxu0 %v1101
        %1156 = vmatpush1.msra.mxu0 %v1100
        %1157 = vmatprep.subr.mxu0 %v1098
        %1158 = vmatpush1.msra.mxu0 %v1097
        %1159 = vmatprep.subr.mxu0 %v1095
        %1160 = vmatpush1.msra.mxu0 %v1094
        %1161 = vmatprep.subr.mxu0 %v1092
        %1162 = vmatpush1.msra.mxu0 %v1091
        %1163 = vmatprep.subr.mxu0 %v1089
        %1164 = vmatpush1.msra.mxu0 %v1088
        %1165 = vmatprep.subr.mxu0 %v1086
        %1166 = vmatpush1.msra.mxu0 %v1085
        %1167 = vmatprep.subr.mxu0 %v1083
        %1168 = vmatpush1.msra.mxu0 %v1082
        %1169 = vmatprep.subr.mxu0 %v1080
        %1170 = vmatpush1.msra.mxu0 %v1079
        %1171 = vmatprep.subr.mxu0 %v1077
        %1172 = vmatpush1.msra.mxu0 %v1076
        %1173 = vmatprep.subr.mxu0 0.0
        %1174 = vmatpush2.msra.mxu0 0.0
        %1175 = vmatprep.subr.mxu0 0.0
        %1176 = vmatpush2.msra.mxu0 0.0
        %1177 = vmatprep.subr.mxu0 0.0
        %1178 = vmatpush2.msra.mxu0 0.0
        %1179 = vmatprep.subr.mxu0 0.0
        %1180 = vmatpush2.msra.mxu0 0.0
        %1181 = vmatprep.subr.mxu0 0.0
        %1182 = vmatpush2.msra.mxu0 0.0
        %1183 = vmatprep.subr.mxu0 0.0
        %1184 = vmatpush2.msra.mxu0 0.0
        %1185 = vmatprep.subr.mxu0 0.0
        %1186 = vmatpush2.msra.mxu0 0.0
        %1187 = vmatprep.subr.mxu0 0.0
        %1188 = vmatpush2.msra.mxu0 0.0
        %1189 = vmatprep.subr.mxu0 0.0
        %1190 = vmatpush2.msra.mxu0 0.0
        %1191 = vmatprep.subr.mxu0 0.0
        %1192 = vmatpush2.msra.mxu0 0.0
        %1193 = vmatprep.subr.mxu0 0.0
        %1194 = vmatpush2.msra.mxu0 0.0
        %1195 = vmatprep.subr.mxu0 0.0
        %1196 = vmatpush2.msra.mxu0 0.0
        %1197 = vmatprep.subr.mxu0 0.0
        %1198 = vmatpush2.msra.mxu0 0.0
        %1199 = vmatprep.subr.mxu0 0.0
        %1200 = vmatpush2.msra.mxu0 0.0
        %1201 = vmatprep.subr.mxu0 0.0
        %1202 = vmatpush2.msra.mxu0 0.0
        %1203 = vmatprep.subr.mxu0 0.0
        %1204 = vmatpush2.msra.mxu0 0.0
        %1205 = vmatprep.mubr.f32.mxu0 0.0
        %1206 = vmatmul.mubr.f32.gmra.mxu0 %v883
        %v1207 = vpop.f32.mrf.mxu0
        %v1208 = vadd.f32 %v1129, %v1207
        %v1209 = vpop.f32.mrf.mxu0
        %v1210 = vadd.f32 %v1133, %v1209
        %1211 = vdwg.mxu0
        %1212 = vmatprep.subr.mxu0 0.0
        %1213 = vmatpush1.msra.mxu0 %v1123
        %1214 = vmatprep.subr.mxu0 0.0
        %1215 = vmatpush1.msra.mxu0 %v1120
        %1216 = vmatprep.subr.mxu0 0.0
        %1217 = vmatpush1.msra.mxu0 %v1117
        %1218 = vmatprep.subr.mxu0 0.0
        %1219 = vmatpush1.msra.mxu0 %v1114
        %1220 = vmatprep.subr.mxu0 0.0
        %1221 = vmatpush1.msra.mxu0 %v1111
        %1222 = vmatprep.subr.mxu0 0.0
        %1223 = vmatpush1.msra.mxu0 %v1108
        %1224 = vmatprep.subr.mxu0 0.0
        %1225 = vmatpush1.msra.mxu0 %v1105
        %1226 = vmatprep.subr.mxu0 0.0
        %1227 = vmatpush1.msra.mxu0 %v1102
        %1228 = vmatprep.subr.mxu0 0.0
        %1229 = vmatpush1.msra.mxu0 %v1099
        %1230 = vmatprep.subr.mxu0 0.0
        %1231 = vmatpush1.msra.mxu0 %v1096
        %1232 = vmatprep.subr.mxu0 0.0
        %1233 = vmatpush1.msra.mxu0 %v1093
        %1234 = vmatprep.subr.mxu0 0.0
        %1235 = vmatpush1.msra.mxu0 %v1090
        %1236 = vmatprep.subr.mxu0 0.0
        %1237 = vmatpush1.msra.mxu0 %v1087
        %1238 = vmatprep.subr.mxu0 0.0
        %1239 = vmatpush1.msra.mxu0 %v1084
        %1240 = vmatprep.subr.mxu0 0.0
        %1241 = vmatpush1.msra.mxu0 %v1081
        %1242 = vmatprep.subr.mxu0 0.0
        %1243 = vmatpush1.msra.mxu0 %v1078
        %1244 = vmatprep.subr.mxu0 0.0
        %1245 = vmatpush2.msra.mxu0 0.0
        %1246 = vmatprep.subr.mxu0 0.0
        %1247 = vmatpush2.msra.mxu0 0.0
        %1248 = vmatprep.subr.mxu0 0.0
        %1249 = vmatpush2.msra.mxu0 0.0
        %1250 = vmatprep.subr.mxu0 0.0
        %1251 = vmatpush2.msra.mxu0 0.0
        %1252 = vmatprep.subr.mxu0 0.0
        %1253 = vmatpush2.msra.mxu0 0.0
        %1254 = vmatprep.subr.mxu0 0.0
        %1255 = vmatpush2.msra.mxu0 0.0
        %1256 = vmatprep.subr.mxu0 0.0
        %1257 = vmatpush2.msra.mxu0 0.0
        %1258 = vmatprep.subr.mxu0 0.0
        %1259 = vmatpush2.msra.mxu0 0.0
        %1260 = vmatprep.subr.mxu0 0.0
        %1261 = vmatpush2.msra.mxu0 0.0
        %1262 = vmatprep.subr.mxu0 0.0
        %1263 = vmatpush2.msra.mxu0 0.0
        %1264 = vmatprep.subr.mxu0 0.0
        %1265 = vmatpush2.msra.mxu0 0.0
        %1266 = vmatprep.subr.mxu0 0.0
        %1267 = vmatpush2.msra.mxu0 0.0
        %1268 = vmatprep.subr.mxu0 0.0
        %1269 = vmatpush2.msra.mxu0 0.0
        %1270 = vmatprep.subr.mxu0 0.0
        %1271 = vmatpush2.msra.mxu0 0.0
        %1272 = vmatprep.subr.mxu0 0.0
        %1273 = vmatpush2.msra.mxu0 0.0
        %1274 = vmatprep.subr.mxu0 0.0
        %1275 = vmatpush2.msra.mxu0 0.0
        %1276 = vmatprep.mubr.f32.mxu0 0.0
        %1277 = vmatmul.mubr.f32.gmra.mxu0 %v883
        %v1278 = vpop.f32.mrf.mxu0
        %v1279 = vadd.f32 %v1137, %v1278
        %v1280 = vpop.f32.mrf.mxu0
        %1281 = vdwg.mxu0
        %v1282 = vadd.f32 %v1002, %v1208
        %v1283 = vxor.u32 %v1282, 2147483648
        %v1284 = vmul.f32 %v1283, 1.442695
        %v1285 = vpow.pop %v1284
        %v1286 = vadd.f32 %v1285, 1.0
        %v1287 = vrcp.pop %v1286
        %v1288 = vmul.f32 1.0, %v1287
        %v1289 = vadd.f32 %v1004, %v1210
        %v1290 = vxor.u32 %v1289, 2147483648
        %v1291 = vmul.f32 %v1290, 1.442695
        %v1292 = vpow.pop %v1291
        %v1293 = vadd.f32 %v1292, 1.0
        %v1294 = vrcp.pop %v1293
        %v1295 = vmul.f32 1.0, %v1294
        %v1296 = vmul.f32 %v1288, %v1279
        %v1297 = vadd.f32 %v1073, %v1296
        %v1298 = vtanh.pop %v1297
        %v1299 = vsub.f32 1.0, %v1295
        %v1300 = vmul.f32 %v1299, %v1298
        %v1301 = vmul.f32 %v1295, %v883
        %v1302 = vadd.f32 %v1300, %v1301
        %1303 = vst [vmem:[#allocation2] sm:$0xff] %v1302
        %v1304 = vld [vmem:[#allocation10] sm:$0xff]
        %v1305 = vld [vmem:[#allocation10 + $0x8] sm:$0xff]
        %v1306 = vld [vmem:[#allocation10 + $0x10] sm:$0xff]
        %v1307 = vld [vmem:[#allocation10 + $0x18] sm:$0xff]
        %v1308 = vld [vmem:[#allocation10 + $0x20] sm:$0xff]
        %v1309 = vld [vmem:[#allocation10 + $0x28] sm:$0xff]
        %v1310 = vld [vmem:[#allocation10 + $0x30] sm:$0xff]
        %v1311 = vld [vmem:[#allocation10 + $0x38] sm:$0xff]
        %v1312 = vld [vmem:[#allocation10 + $0x40] sm:$0xff]
        %v1313 = vld [vmem:[#allocation10 + $0x48] sm:$0xff]
        %v1314 = vld [vmem:[#allocation10 + $0x50] sm:$0xff]
        %v1315 = vld [vmem:[#allocation10 + $0x58] sm:$0xff]
        %v1316 = vld [vmem:[#allocation10 + $0x60] sm:$0xff]
        %v1317 = vld [vmem:[#allocation10 + $0x68] sm:$0xff]
        %v1318 = vld [vmem:[#allocation10 + $0x70] sm:$0xff]
        %v1319 = vld [vmem:[#allocation10 + $0x78] sm:$0xff]
        %v1320 = vld [vmem:[#allocation13] sm:$0xff]
        %v1321 = vld [vmem:[#allocation13 + $0x8] sm:$0xff]
        %v1322 = vld [vmem:[#allocation13 + $0x10] sm:$0xff]
        %v1323 = vld [vmem:[#allocation13 + $0x18] sm:$0xff]
        %v1324 = vld [vmem:[#allocation13 + $0x20] sm:$0xff]
        %v1325 = vld [vmem:[#allocation13 + $0x28] sm:$0xff]
        %v1326 = vld [vmem:[#allocation13 + $0x30] sm:$0xff]
        %v1327 = vld [vmem:[#allocation13 + $0x38] sm:$0xff]
        %v1328 = vld [vmem:[#allocation13 + $0x40] sm:$0xff]
        %v1329 = vld [vmem:[#allocation13 + $0x48] sm:$0xff]
        %v1330 = vld [vmem:[#allocation13 + $0x50] sm:$0xff]
        %v1331 = vld [vmem:[#allocation13 + $0x58] sm:$0xff]
        %v1332 = vld [vmem:[#allocation13 + $0x60] sm:$0xff]
        %v1333 = vld [vmem:[#allocation13 + $0x68] sm:$0xff]
        %v1334 = vld [vmem:[#allocation13 + $0x70] sm:$0xff]
        %v1335 = vld [vmem:[#allocation13 + $0x78] sm:$0xff]
        %1336 = vmatprep.subr.mxu0 0.0
        %1337 = vmatpush1.msra.mxu0 %v1335
        %1338 = vmatprep.subr.mxu0 0.0
        %1339 = vmatpush1.msra.mxu0 %v1334
        %1340 = vmatprep.subr.mxu0 0.0
        %1341 = vmatpush1.msra.mxu0 %v1333
        %1342 = vmatprep.subr.mxu0 0.0
        %1343 = vmatpush1.msra.mxu0 %v1332
        %1344 = vmatprep.subr.mxu0 0.0
        %1345 = vmatpush1.msra.mxu0 %v1331
        %1346 = vmatprep.subr.mxu0 0.0
        %1347 = vmatpush1.msra.mxu0 %v1330
        %1348 = vmatprep.subr.mxu0 0.0
        %1349 = vmatpush1.msra.mxu0 %v1329
        %1350 = vmatprep.subr.mxu0 0.0
        %1351 = vmatpush1.msra.mxu0 %v1328
        %1352 = vmatprep.subr.mxu0 0.0
        %1353 = vmatpush1.msra.mxu0 %v1327
        %1354 = vmatprep.subr.mxu0 0.0
        %1355 = vmatpush1.msra.mxu0 %v1326
        %1356 = vmatprep.subr.mxu0 0.0
        %1357 = vmatpush1.msra.mxu0 %v1325
        %1358 = vmatprep.subr.mxu0 0.0
        %1359 = vmatpush1.msra.mxu0 %v1324
        %1360 = vmatprep.subr.mxu0 0.0
        %1361 = vmatpush1.msra.mxu0 %v1323
        %1362 = vmatprep.subr.mxu0 0.0
        %1363 = vmatpush1.msra.mxu0 %v1322
        %1364 = vmatprep.subr.mxu0 0.0
        %1365 = vmatpush1.msra.mxu0 %v1321
        %1366 = vmatprep.subr.mxu0 0.0
        %1367 = vmatpush1.msra.mxu0 %v1320
        %1368 = vmatprep.subr.mxu0 0.0
        %1369 = vmatpush2.msra.mxu0 0.0
        %1370 = vmatprep.subr.mxu0 0.0
        %1371 = vmatpush2.msra.mxu0 0.0
        %1372 = vmatprep.subr.mxu0 0.0
        %1373 = vmatpush2.msra.mxu0 0.0
        %1374 = vmatprep.subr.mxu0 0.0
        %1375 = vmatpush2.msra.mxu0 0.0
        %1376 = vmatprep.subr.mxu0 0.0
        %1377 = vmatpush2.msra.mxu0 0.0
        %1378 = vmatprep.subr.mxu0 0.0
        %1379 = vmatpush2.msra.mxu0 0.0
        %1380 = vmatprep.subr.mxu0 0.0
        %1381 = vmatpush2.msra.mxu0 0.0
        %1382 = vmatprep.subr.mxu0 0.0
        %1383 = vmatpush2.msra.mxu0 0.0
        %1384 = vmatprep.subr.mxu0 0.0
        %1385 = vmatpush2.msra.mxu0 0.0
        %1386 = vmatprep.subr.mxu0 0.0
        %1387 = vmatpush2.msra.mxu0 0.0
        %1388 = vmatprep.subr.mxu0 0.0
        %1389 = vmatpush2.msra.mxu0 0.0
        %1390 = vmatprep.subr.mxu0 0.0
        %1391 = vmatpush2.msra.mxu0 0.0
        %1392 = vmatprep.subr.mxu0 0.0
        %1393 = vmatpush2.msra.mxu0 0.0
        %1394 = vmatprep.subr.mxu0 0.0
        %1395 = vmatpush2.msra.mxu0 0.0
        %1396 = vmatprep.subr.mxu0 0.0
        %1397 = vmatpush2.msra.mxu0 0.0
        %1398 = vmatprep.subr.mxu0 0.0
        %1399 = vmatpush2.msra.mxu0 0.0
        %1400 = vmatprep.mubr.f32.mxu0 0.0
        %1401 = vmatmul.mubr.f32.gmra.mxu0 %v880
        %v1402 = vpop.f32.mrf.mxu0
        %v1403 = vadd.f32 0.0, %v1402
        %v1404 = vpop.f32.mrf.mxu0
        %1405 = vdwg.mxu0
        %1406 = vmatprep.subr.mxu0 0.0
        %1407 = vmatpush1.msra.mxu0 %v1319
        %1408 = vmatprep.subr.mxu0 0.0
        %1409 = vmatpush1.msra.mxu0 %v1318
        %1410 = vmatprep.subr.mxu0 0.0
        %1411 = vmatpush1.msra.mxu0 %v1317
        %1412 = vmatprep.subr.mxu0 0.0
        %1413 = vmatpush1.msra.mxu0 %v1316
        %1414 = vmatprep.subr.mxu0 0.0
        %1415 = vmatpush1.msra.mxu0 %v1315
        %1416 = vmatprep.subr.mxu0 0.0
        %1417 = vmatpush1.msra.mxu0 %v1314
        %1418 = vmatprep.subr.mxu0 0.0
        %1419 = vmatpush1.msra.mxu0 %v1313
        %1420 = vmatprep.subr.mxu0 0.0
        %1421 = vmatpush1.msra.mxu0 %v1312
        %1422 = vmatprep.subr.mxu0 0.0
        %1423 = vmatpush1.msra.mxu0 %v1311
        %1424 = vmatprep.subr.mxu0 0.0
        %1425 = vmatpush1.msra.mxu0 %v1310
        %1426 = vmatprep.subr.mxu0 0.0
        %1427 = vmatpush1.msra.mxu0 %v1309
        %1428 = vmatprep.subr.mxu0 0.0
        %1429 = vmatpush1.msra.mxu0 %v1308
        %1430 = vmatprep.subr.mxu0 0.0
        %1431 = vmatpush1.msra.mxu0 %v1307
        %1432 = vmatprep.subr.mxu0 0.0
        %1433 = vmatpush1.msra.mxu0 %v1306
        %1434 = vmatprep.subr.mxu0 0.0
        %1435 = vmatpush1.msra.mxu0 %v1305
        %1436 = vmatprep.subr.mxu0 0.0
        %1437 = vmatpush1.msra.mxu0 %v1304
        %1438 = vmatprep.subr.mxu0 0.0
        %1439 = vmatpush2.msra.mxu0 0.0
        %1440 = vmatprep.subr.mxu0 0.0
        %1441 = vmatpush2.msra.mxu0 0.0
        %1442 = vmatprep.subr.mxu0 0.0
        %1443 = vmatpush2.msra.mxu0 0.0
        %1444 = vmatprep.subr.mxu0 0.0
        %1445 = vmatpush2.msra.mxu0 0.0
        %1446 = vmatprep.subr.mxu0 0.0
        %1447 = vmatpush2.msra.mxu0 0.0
        %1448 = vmatprep.subr.mxu0 0.0
        %1449 = vmatpush2.msra.mxu0 0.0
        %1450 = vmatprep.subr.mxu0 0.0
        %1451 = vmatpush2.msra.mxu0 0.0
        %1452 = vmatprep.subr.mxu0 0.0
        %1453 = vmatpush2.msra.mxu0 0.0
        %1454 = vmatprep.subr.mxu0 0.0
        %1455 = vmatpush2.msra.mxu0 0.0
        %1456 = vmatprep.subr.mxu0 0.0
        %1457 = vmatpush2.msra.mxu0 0.0
        %1458 = vmatprep.subr.mxu0 0.0
        %1459 = vmatpush2.msra.mxu0 0.0
        %1460 = vmatprep.subr.mxu0 0.0
        %1461 = vmatpush2.msra.mxu0 0.0
        %1462 = vmatprep.subr.mxu0 0.0
        %1463 = vmatpush2.msra.mxu0 0.0
        %1464 = vmatprep.subr.mxu0 0.0
        %1465 = vmatpush2.msra.mxu0 0.0
        %1466 = vmatprep.subr.mxu0 0.0
        %1467 = vmatpush2.msra.mxu0 0.0
        %1468 = vmatprep.subr.mxu0 0.0
        %1469 = vmatpush2.msra.mxu0 0.0
        %1470 = vmatprep.mubr.f32.mxu0 0.0
        %1471 = vmatmul.mubr.f32.gmra.mxu0 %v1302
        %v1472 = vpop.f32.mrf.mxu0
        %v1473 = vadd.f32 %v1403, %v1472
        %v1474 = vpop.f32.mrf.mxu0
        %1475 = vdwg.mxu0
        %v1476 = vld [vmem:[#allocation5] sm:$0xff]
        %v1477 = vadd.f32 %v1473, %v1476
        %1478 = vst [vmem:[%s474] sm:$0xff] %v1477
        %v1479 = vlaneseq
        %v1480 = vand.u32 %v1479, 127
        %vm1481 = vcmp.lt.s32.totalorder %v1480, 40
        %v1482 = vsel %vm1481, %v1477, -1e+30
        %1483 = vmax.xlane.f32.xlu0 %v1482
        %v1484 = vpop.xlane.xlu0 %1483
        %vm1485 = vcmp.eq.f32.partialorder %v1482, %v1484
        %v1486 = vsel %vm1485, %v1480, 128
        %v1487 = vand.u32 %v1486, 65535
        %v1488 = vshra.s32 %v1486, 16
        %v1489 = vcvt.s32.f32 %v1487
        %v1490 = vcvt.s32.f32 %v1488
        %1491 = vmin.xlane.f32.xlu0 %v1490
        %v1492 = vpop.xlane.xlu0 %1491
        %vm1493 = vcmp.eq.f32.partialorder %v1490, %v1492
        %v1494 = vsel %vm1493, %v1489, inf
        %1495 = vmin.xlane.f32.xlu0 %v1494
        %v1496 = vpop.xlane.xlu0 %1495
        %v1497 = vcvt.f32.s32 %v1496
        %v1498 = vcvt.f32.s32 %v1492
        %v1499 = vshll.u32 %v1498, 16
        %v1500 = vadd.s32 %v1499, %v1497
        %vm1501 = vcmp.eq.s32.totalorder %v1480, %v1500
        %v1502 = vsel %vm1501, 1, 0
        %v1503 = vcvt.s32.f32 %v1502
        %1504 = vst [vmem:[#allocation3] sm:$0xff] %v1503
        %p1505 = scmp.lt.s32.totalorder %s33, 3
        %s1506 = scalar_select %p1505, %s33, 3
        %s1507 = smul.addr %s1506, 8
        %s1508 = scalar_lea.vmem %s13, %s1507
        // Predicated region
        $region89: #{seq2seq_forward.3} parent=67 // pred_check
          %p1509 = pneg %p308
        $region90: #{seq2seq_forward.3} parent=67 // pred_check_branch
          %1511 = sbr.rel (%p1509) target = $region92
        $region91: #{seq2seq_forward.3} parent=67 // pred_region
          _
        $region92: #{seq2seq_forward.3} parent=67 // pred_fallthru
          _
      $region68: #{seq2seq_forward.3} parent=5 // pred_fallthru
        _
      %p1512 = scmp.le.s32.totalorder 2, %s28
      // Predicated region
      $region93: #{seq2seq_forward.3} parent=5 // pred_check
        %p1513 = pneg %p1512
      $region94: #{seq2seq_forward.3} parent=5 // pred_check_branch
        %1515 = sbr.rel (%p1513) target = $region96
      $region95: #{seq2seq_forward.3} parent=5 // pred_region
        %s1516 = ssub.s32 %s28, 2
        // Predicated region
        $region97: #{seq2seq_forward.3} parent=95 // pred_check
          %p1517 = pneg %p314
        $region98: #{seq2seq_forward.3} parent=95 // pred_check_branch
          %1519 = sbr.rel (%p1517) target = $region100
        $region99: #{seq2seq_forward.3} parent=95 // pred_region
          %p1520 = scmp.lt.s32.totalorder %s34, 3
          %s1521 = scalar_select %p1520, %s34, 3
          %s1522 = smul.addr %s1521, 8
          %s1523 = scalar_lea.vmem %s13, %s1522
        $region100: #{seq2seq_forward.3} parent=95 // pred_fallthru
          _
      $region96: #{seq2seq_forward.3} parent=5 // pred_fallthru
        _
    $region6: #{seq2seq_forward.3} parent=1 // loop_footer
      %s32 = sadd.s32 1, %s28
    $region7: #{seq2seq_forward.3} parent=1 // loop_footer_branch
      %27 = sbr.rel target = $region3
    $region8: #{seq2seq_forward.3} parent=1 // loop_exit
      _
    %1524 = vsyncpa [#allocation9], 1
    %s1525 = scalar_lea.sflag [#allocation9], 1
    %1526 = vsyncpa %s1525, 1
    %1527 = vsyncpa [#allocation11], 1
    %1528 = vsyncpa [#allocation14], 1

</llo_original>
